<compile_context>
chip_gen: v5e
topology: v5e:2x2
jax: 0.10.0
libtpu: 0.0.40
codegen_flags: <defaults>
</compile_context>

<pallas_src>
import math
import jax
import jax.numpy as jnp
from jax.experimental import pallas as pl
from jax.experimental.pallas import tpu as pltpu  # noqa: F401  (TPU backend)


_CONV_ORDER = ("d1c1", "d1c2", "d2c1", "d2c2", "d3c1", "d3c2", "mc1", "mc2",
               "u1t", "u1c", "u2t", "u2c", "u3t", "u3c")


def _round8(n):
    return -(-n // 8) * 8


# ----------------------------------------------------------------------------
# Fused Pallas kernel
# ----------------------------------------------------------------------------

def _build_fused_kernel(B, L, meta, n_layers):
    P = B * L
    f32, bf16 = jnp.float32, jnp.bfloat16

    def kernel(x_ref, embce_ref, mlpw_ref, mlpb_ref, wpk_ref, bpk_ref,
               y_ref, temb_ref):
        lane = jax.lax.broadcasted_iota(jnp.int32, (1, P), 1)
        lane_mod = lane % L                 # position inside each batch element

        def mm(a, b):
            # bf16 single-pass MXU dot, f32 accumulate.
            return jnp.dot(a.astype(bf16), b.astype(bf16),
                           preferred_element_type=f32)

        def shr(v, s):                      # out[:, p] = v[:, p - s]; 0 for p < s
            zero = jnp.zeros((v.shape[0], s), f32)
            return jnp.concatenate([zero, v[:, :P - s]], axis=1)

        def shl(v, s):                      # out[:, p] = v[:, p + s]; 0 for p >= P - s
            zero = jnp.zeros((v.shape[0], s), f32)
            return jnp.concatenate([v[:, s:], zero], axis=1)

        def conv3(h, name, s, relu):
            """Conv1d(kernel=3, padding=1) on a (Cin, P) slab whose valid
            samples sit at lane stride s inside each length-L segment."""
            off, _k, cin, cout, ts, bcol = meta[name]
            w = wpk_ref[off:off + 3 * ts, :cin]            # (3*ts, cin) bf16
            y = mm(w, h)                                   # (3*ts, P) f32
            y0 = y[0:cout]                                 # tap on x[l-1]
            y1 = y[ts:ts + cout]                           # tap on x[l]
            y2 = y[2 * ts:2 * ts + cout]                   # tap on x[l+1]
            prev = jnp.where(lane_mod >= s, shr(y0, s), 0.0)
            nxt = jnp.where(lane_mod < L - s, shl(y2, s), 0.0)
            acc = prev + y1 + nxt + bpk_ref[0:cout, bcol:bcol + 1]
            return jnp.maximum(acc, 0.0) if relu else acc

        def maxpool2(h, s):
            """MaxPool1d(2): valid samples move from lane stride s to 2s."""
            return jnp.maximum(h, shl(h, s))

        def convt2_relu(h, name, s_in):
            """ConvTranspose1d(kernel=2, stride=2)+ReLU: stride s_in -> s_in/2."""
            off, _k, cin, cout, ts, bcol = meta[name]
            s_out = s_in // 2
            w = wpk_ref[off:off + 2 * ts, :cin]            # (2*ts, cin) bf16
            y = mm(w, h)
            y0, y1 = y[0:cout], y[ts:ts + cout]
            out = jnp.where(lane % s_in == 0, y0, shr(y1, s_out))
            out = out + bpk_ref[0:cout, bcol:bcol + 1]
            return jnp.maximum(out, 0.0)

        # Time-conditioning MLP (computed for fidelity; it does not feed the
        # conv path in the reference module).
        emb, ce = embce_ref[0], embce_ref[1]
        hmlp = jnp.maximum(mm(emb, mlpw_ref[0]) + mlpb_ref[0:1, :], 0.0)
        temb_ref[...] = mm(hmlp, mlpw_ref[1]) + mlpb_ref[1:2, :] + ce

        # UNet conv path; the whole batch per matmul, intermediates in vregs.
        h = x_ref[...].astype(f32)                         # (1, B*L)
        h = conv3(h, "d1c1", 1, True)
        h = conv3(h, "d1c2", 1, False)
        x1 = maxpool2(h, 1)                                # valid @ stride 2
        h = conv3(x1, "d2c1", 2, True)
        h = conv3(h, "d2c2", 2, False)
        x2 = maxpool2(h, 2)                                # valid @ stride 4
        h = conv3(x2, "d3c1", 4, True)
        h = conv3(h, "d3c2", 4, False)
        x3 = maxpool2(h, 4)                                # valid @ stride 8
        h = conv3(x3, "mc1", 8, True)
        x_mid = conv3(h, "mc2", 8, False) + x3             # residual
        h = convt2_relu(x_mid, "u1t", 8)                   # -> stride 4
        x_up1 = conv3(h, "u1c", 4, False) + x2             # residual
        h = convt2_relu(x_up1, "u2t", 4)                   # -> stride 2
        x_up2 = conv3(h, "u2c", 2, False) + x1             # residual
        h = convt2_relu(x_up2, "u3t", 2)                   # -> stride 1
        x_up3 = conv3(h, "u3c", 1, False)                  # (1, B*L)
        ow = bpk_ref[0:1, n_layers:n_layers + 1]           # fused 1x1 out conv
        ob = bpk_ref[0:1, n_layers + 1:n_layers + 2]
        y_ref[...] = (x_up3 * ow + ob).astype(y_ref.dtype)

    return kernel


# ----------------------------------------------------------------------------
# Parameter packing (wrapper-side glue, tiny)
# ----------------------------------------------------------------------------

def pack_params(params):
    """Pack all conv/convT weights + biases into two arrays (+ static meta).

    Weight pack: bf16 (R, CMAX).  Each layer owns K row-blocks of
    `tap_stride = round8(Cout)` rows so every in-kernel slice starts on an
    8-aligned sublane; block k holds W[k].T (Cout, Cin), zero-padded.
    Bias pack: f32 (16, n_layers + 2); column j = layer j's bias, the last
    two columns hold the 1x1 out-conv weight and bias (row 0).
    """
    cmax = max(params[n][0].shape[1] for n in _CONV_ORDER)
    bmax = max(params[n][0].shape[2] for n in _CONV_ORDER)
    blocks, meta, off = [], {}, 0
    for j, name in enumerate(_CONV_ORDER):
        w, _ = params[name]                                # (K, Cin, Cout)
        k, cin, cout = w.shape
        ts = _round8(cout)
        blk = jnp.zeros((k * ts, cmax), jnp.float32)
        for tap in range(k):
            blk = blk.at[tap * ts:tap * ts + cout, :cin].set(w[tap].T)
        blocks.append(blk)
        meta[name] = (off, k, cin, cout, ts, j)
        off += k * ts
    wpk = jnp.concatenate(blocks, axis=0).astype(jnp.bfloat16)

    n_layers = len(_CONV_ORDER)
    bpk = jnp.zeros((max(bmax, 8), n_layers + 2), jnp.float32)
    for j, name in enumerate(_CONV_ORDER):
        b = params[name][1]
        bpk = bpk.at[:b.shape[0], j].set(b)
    bpk = bpk.at[0, n_layers].set(params["out_w"][0])
    bpk = bpk.at[0, n_layers + 1].set(params["out_b"][0])

    mlpw = jnp.stack([params["mlp_w1"], params["mlp_w2"]]).astype(jnp.bfloat16)
    mlpb = jnp.stack([params["mlp_b1"], params["mlp_b2"]])
    return wpk, bpk, mlpw, mlpb, meta


def unet_fused_call(params, xr, emb, ce, B, L):
    """One grid-less pallas_call for the whole network (6 operands)."""
    wpk, bpk, mlpw, mlpb, meta = pack_params(params)
    embce = jnp.stack([emb, ce])                           # (2, B, 128)
    kernel = _build_fused_kernel(B, L, meta, len(_CONV_ORDER))
    return pl.pallas_call(
        kernel,
        out_shape=(jax.ShapeDtypeStruct((1, B * L), jnp.float32),
                   jax.ShapeDtypeStruct((B, emb.shape[1]), jnp.float32)),
    )(xr, embce, mlpw, mlpb, wpk, bpk)


# ----------------------------------------------------------------------------
# Parameter init (deterministic, PyTorch-shaped, converted to kernel layout)
# ----------------------------------------------------------------------------

def init_params(key, num_classes, base_ch, time_dim=128):
    keys = iter(jax.random.split(key, 64))

    def conv_like(cin, cout, k, fan_in=None):
        # Conv1d: fan_in = cin*k.  ConvTranspose1d: fan_in = cout*k.
        fan_in = cin * k if fan_in is None else fan_in
        bound = 1.0 / math.sqrt(fan_in)
        w = jax.random.uniform(next(keys), (k, cin, cout), jnp.float32,
                               -bound, bound)
        b = jax.random.uniform(next(keys), (cout,), jnp.float32, -bound, bound)
        return w, b

    def linear(din, dout):
        bound = 1.0 / math.sqrt(din)
        w = jax.random.uniform(next(keys), (din, dout), jnp.float32,
                               -bound, bound)
        b = jax.random.uniform(next(keys), (dout,), jnp.float32, -bound, bound)
        return w, b

    bc = base_ch
    p = {}
    p["cond_emb"] = jax.random.normal(next(keys), (num_classes, time_dim),
                                      jnp.float32)
    p["mlp_w1"], p["mlp_b1"] = linear(time_dim, time_dim)
    p["mlp_w2"], p["mlp_b2"] = linear(time_dim, time_dim)
    p["d1c1"] = conv_like(1, bc, 3);          p["d1c2"] = conv_like(bc, bc, 3)
    p["d2c1"] = conv_like(bc, 2 * bc, 3);     p["d2c2"] = conv_like(2 * bc, 2 * bc, 3)
    p["d3c1"] = conv_like(2 * bc, 2 * bc, 3); p["d3c2"] = conv_like(2 * bc, 2 * bc, 3)
    p["mc1"] = conv_like(2 * bc, 2 * bc, 3);  p["mc2"] = conv_like(2 * bc, 2 * bc, 3)
    p["u1t"] = conv_like(2 * bc, 2 * bc, 2, fan_in=2 * bc * 2)
    p["u1c"] = conv_like(2 * bc, 2 * bc, 3)
    p["u2t"] = conv_like(2 * bc, bc, 2, fan_in=bc * 2)
    p["u2c"] = conv_like(bc, bc, 3)
    p["u3t"] = conv_like(bc, 1, 2, fan_in=1 * 2)
    p["u3c"] = conv_like(1, 1, 3)
    ow, ob = conv_like(1, 1, 1)
    p["out_w"], p["out_b"] = ow.reshape(1), ob.reshape(1)
    return p


# ----------------------------------------------------------------------------
# Forward pass (matches UNet1D.forward semantics)
# ----------------------------------------------------------------------------

def timestep_embedding(t, dim=128):
    half = dim // 2
    freqs = jnp.exp(-math.log(10000.0)
                    * jnp.arange(half, dtype=jnp.float32) / half)
    args = t.astype(jnp.float32)[:, None] * freqs[None, :]
    return jnp.concatenate([jnp.sin(args), jnp.cos(args)], axis=1)


def unet1d_forward(params, x, t, cond):
    # x: (B, 1, L) PyTorch NCL layout; channel dim is 1 so the reshape to a
    # single lane-dense (1, B*L) row is free.
    B, _, L = x.shape
    xr = x.reshape(1, B * L)
    emb = timestep_embedding(t, 128)                 # glue
    ce = params["cond_emb"][cond]                    # glue: embedding gather
    y, t_emb = unet_fused_call(params, xr, emb, ce, B, L)
    return y.reshape(B, 1, L), t_emb


# ----------------------------------------------------------------------------
# Pure-JAX reference (independent formulation) for correctness checking
# ----------------------------------------------------------------------------

def _ref_forward(params, x, t, cond):
    def conv3(h, wb, relu):
        w, b = wb
        hp = jnp.pad(h, ((0, 0), (1, 1), (0, 0)))
        out = (jnp.einsum("blc,cd->bld", hp[:, :-2], w[0])
               + jnp.einsum("blc,cd->bld", hp[:, 1:-1], w[1])
               + jnp.einsum("blc,cd->bld", hp[:, 2:], w[2]) + b)
        return jnp.maximum(out, 0.0) if relu else out

    def pool2(h):
        B_, L_, C_ = h.shape
        return h.reshape(B_, L_ // 2, 2, C_).max(axis=2)

    def convt2(h, wb):
        w, b = wb
        y0 = jnp.einsum("blc,cd->bld", h, w[0]) + b
        y1 = jnp.einsum("blc,cd->bld", h, w[1]) + b
        B_, L_, C_ = y0.shape
        return jnp.maximum(jnp.stack([y0, y1], 2).reshape(B_, 2 * L_, C_), 0.0)

    xl = jnp.transpose(x, (0, 2, 1)).astype(jnp.float32)
    emb = timestep_embedding(t, 128)
    hm = jnp.maximum(emb @ params["mlp_w1"] + params["mlp_b1"], 0.0)
    t_emb = hm @ params["mlp_w2"] + params["mlp_b2"] + params["cond_emb"][cond]

    h = conv3(xl, params["d1c1"], True); h = conv3(h, params["d1c2"], False); x1 = pool2(h)
    h = conv3(x1, params["d2c1"], True); h = conv3(h, params["d2c2"], False); x2 = pool2(h)
    h = conv3(x2, params["d3c1"], True); h = conv3(h, params["d3c2"], False); x3 = pool2(h)
    h = conv3(x3, params["mc1"], True); x_mid = conv3(h, params["mc2"], False) + x3
    x_up1 = conv3(convt2(x_mid, params["u1t"]), params["u1c"], False) + x2
    x_up2 = conv3(convt2(x_up1, params["u2t"]), params["u2c"], False) + x1
    x_up3 = conv3(convt2(x_up2, params["u3t"]), params["u3c"], False)
    y = x_up3 * params["out_w"][0] + params["out_b"][0]
    return jnp.transpose(y, (0, 2, 1)), t_emb


# ----------------------------------------------------------------------------
# Main
# ----------------------------------------------------------------------------

if __name__ == "__main__":
    B, L = 2, 16
    base_ch = 8
    num_classes = 4

    key = jax.random.PRNGKey(0)
    k_param, k_x, k_t, k_c = jax.random.split(key, 4)

    params = init_params(k_param, num_classes, base_ch)
    x = jax.random.normal(k_x, (B, 1, L), dtype=jnp.float32)
    t = jax.random.randint(k_t, (B,), 0, 1000)
    cond = jax.random.randint(k_c, (B,), 0, num_classes)

    fwd = jax.jit(unet1d_forward)
    y, t_emb = fwd(params, x, t, cond)
    jax.block_until_ready((y, t_emb))

    assert y.shape == (B, 1, L), y.shape
    assert t_emb.shape == (B, 128), t_emb.shape
    assert bool(jnp.all(jnp.isfinite(y))) and bool(jnp.all(jnp.isfinite(t_emb)))

    # Cross-check against the plain-JAX f32 reference.  Tolerance budgets for
    # the single-pass bf16 MXU dots used inside the kernel.
    y_ref, t_ref = _ref_forward(params, x, t, cond)
    assert bool(jnp.allclose(y, y_ref, atol=3e-2, rtol=3e-2)), \
        float(jnp.max(jnp.abs(y - y_ref)))
    assert bool(jnp.allclose(t_emb, t_ref, atol=3e-2, rtol=3e-2)), \
        float(jnp.max(jnp.abs(t_emb - t_ref)))

    print("KERNEL_OK")
</pallas_src>

<mosaic_0001>
module attributes {stable_mosaic.version = 11 : i64} {
  func.func @kernel(%arg0: memref<1x32xf32, #tpu.memory_space<vmem>>, %arg1: memref<2x2x128xf32, #tpu.memory_space<vmem>>, %arg2: memref<2x128x128xbf16, #tpu.memory_space<vmem>>, %arg3: memref<2x128xf32, #tpu.memory_space<vmem>>, %arg4: memref<496x16xbf16, #tpu.memory_space<vmem>>, %arg5: memref<16x16xf32, #tpu.memory_space<vmem>>, %arg6: memref<1x32xf32, #tpu.memory_space<vmem>>, %arg7: memref<2x128xf32, #tpu.memory_space<vmem>>) attributes {dimension_semantics = [], scalar_prefetch = 0 : i64, scratch_operands = 0 : i64, tpu.core_type = #tpu.core_type<tc>} {
    %0 = tpu.iota {dimensions = array<i32: 1>} : vector<1x32xi32>
    %c16_i32 = arith.constant 16 : i32
    %c0_i32 = arith.constant 0 : i32
    %1 = arith.cmpi eq, %c16_i32, %c0_i32 : i32
    %c1_i32 = arith.constant 1 : i32
    %2 = arith.select %1, %c1_i32, %c16_i32 : i32
    %3 = vector.broadcast %2 : i32 to vector<1x32xi32>
    %4 = arith.remsi %0, %3 : vector<1x32xi32>
    %c0_i32_0 = arith.constant 0 : i32
    %5 = vector.broadcast %c0_i32_0 : i32 to vector<1x32xi32>
    %6 = arith.cmpi ne, %4, %5 : vector<1x32xi32>
    %c0_i32_1 = arith.constant 0 : i32
    %7 = vector.broadcast %c0_i32_1 : i32 to vector<1x32xi32>
    %8 = arith.cmpi slt, %4, %7 : vector<1x32xi32>
    %c0_i32_2 = arith.constant 0 : i32
    %9 = arith.cmpi slt, %2, %c0_i32_2 : i32
    %10 = vector.broadcast %9 : i1 to vector<1x32xi1>
    %11 = vector.broadcast %10 : vector<1x32xi1> to vector<1x32xi1>
    %12 = arith.xori %8, %11 : vector<1x32xi1>
    %13 = arith.andi %12, %6 : vector<1x32xi1>
    %14 = vector.broadcast %2 : i32 to vector<1x32xi32>
    %15 = arith.addi %4, %14 : vector<1x32xi32>
    %16 = arith.select %13, %15, %4 : vector<1x32xi1>, vector<1x32xi32>
    %c0 = arith.constant 0 : index
    %c0_3 = arith.constant 0 : index
    %c0_4 = arith.constant 0 : index
    %17 = vector.load %arg1[%c0, %c0_3, %c0_4] : memref<2x2x128xf32, #tpu.memory_space<vmem>>, vector<1x2x128xf32>
    %18 = vector.shape_cast %17 : vector<1x2x128xf32> to vector<2x128xf32>
    %c1 = arith.constant 1 : index
    %c0_5 = arith.constant 0 : index
    %c0_6 = arith.constant 0 : index
    %19 = vector.load %arg1[%c1, %c0_5, %c0_6] : memref<2x2x128xf32, #tpu.memory_space<vmem>>, vector<1x2x128xf32>
    %20 = vector.shape_cast %19 : vector<1x2x128xf32> to vector<2x128xf32>
    %c0_7 = arith.constant 0 : index
    %c0_8 = arith.constant 0 : index
    %c0_9 = arith.constant 0 : index
    %21 = vector.load %arg2[%c0_7, %c0_8, %c0_9] : memref<2x128x128xbf16, #tpu.memory_space<vmem>>, vector<1x128x128xbf16>
    %22 = vector.shape_cast %21 : vector<1x128x128xbf16> to vector<128x128xbf16>
    %23 = arith.truncf %18 : vector<2x128xf32> to vector<2x128xbf16>
    %cst = arith.constant dense<0.000000e+00> : vector<2x128xf32>
    %24 = tpu.matmul %23, %22, %cst {dimension_numbers = #tpu.dot_dimension_numbers<[1], [0], [0], [1], [0, 0, 1, 1], [], []>} : vector<2x128xbf16>, vector<128x128xbf16>, vector<2x128xf32> -> vector<2x128xf32>
    %c0_10 = arith.constant 0 : index
    %c0_11 = arith.constant 0 : index
    %25 = vector.load %arg3[%c0_10, %c0_11] : memref<2x128xf32, #tpu.memory_space<vmem>>, vector<1x128xf32>
    %26 = vector.broadcast %25 : vector<1x128xf32> to vector<2x128xf32>
    %27 = arith.addf %24, %26 : vector<2x128xf32>
    %cst_12 = arith.constant 0.000000e+00 : f32
    %28 = vector.broadcast %cst_12 : f32 to vector<2x128xf32>
    %29 = arith.maximumf %27, %28 : vector<2x128xf32>
    %c1_13 = arith.constant 1 : index
    %c0_14 = arith.constant 0 : index
    %c0_15 = arith.constant 0 : index
    %30 = vector.load %arg2[%c1_13, %c0_14, %c0_15] : memref<2x128x128xbf16, #tpu.memory_space<vmem>>, vector<1x128x128xbf16>
    %31 = vector.shape_cast %30 : vector<1x128x128xbf16> to vector<128x128xbf16>
    %32 = arith.truncf %29 : vector<2x128xf32> to vector<2x128xbf16>
    %cst_16 = arith.constant dense<0.000000e+00> : vector<2x128xf32>
    %33 = tpu.matmul %32, %31, %cst_16 {dimension_numbers = #tpu.dot_dimension_numbers<[1], [0], [0], [1], [0, 0, 1, 1], [], []>} : vector<2x128xbf16>, vector<128x128xbf16>, vector<2x128xf32> -> vector<2x128xf32>
    %c1_17 = arith.constant 1 : index
    %c0_18 = arith.constant 0 : index
    %34 = vector.load %arg3[%c1_17, %c0_18] : memref<2x128xf32, #tpu.memory_space<vmem>>, vector<1x128xf32>
    %35 = vector.broadcast %34 : vector<1x128xf32> to vector<2x128xf32>
    %36 = arith.addf %33, %35 : vector<2x128xf32>
    %37 = arith.addf %36, %20 : vector<2x128xf32>
    %c0_19 = arith.constant 0 : index
    %c0_20 = arith.constant 0 : index
    %38 = vector.load %arg7[%c0_19, %c0_20] : memref<2x128xf32, #tpu.memory_space<vmem>>, vector<2x128xf32>
    tpu.vector_store %arg7[%c0_19, %c0_20], %37 {strides = array<i32>} : memref<2x128xf32, #tpu.memory_space<vmem>>, vector<2x128xf32>,
    %c0_21 = arith.constant 0 : index
    %c0_22 = arith.constant 0 : index
    %39 = vector.load %arg0[%c0_21, %c0_22] : memref<1x32xf32, #tpu.memory_space<vmem>>, vector<1x32xf32>
    %c0_23 = arith.constant 0 : index
    %c0_24 = arith.constant 0 : index
    %40 = vector.load %arg4[%c0_23, %c0_24] : memref<496x16xbf16, #tpu.memory_space<vmem>>, vector<24x1xbf16>
    %41 = arith.truncf %39 : vector<1x32xf32> to vector<1x32xbf16>
    %cst_25 = arith.constant dense<0.000000e+00> : vector<24x32xf32>
    %42 = tpu.matmul %40, %41, %cst_25 {dimension_numbers = #tpu.dot_dimension_numbers<[1], [0], [0], [1], [0, 0, 1, 1], [], []>} : vector<24x1xbf16>, vector<1x32xbf16>, vector<24x32xf32> -> vector<24x32xf32>
    %43 = vector.extract_strided_slice %42 {offsets = [0, 0], sizes = [8, 32], strides = [1, 1]} : vector<24x32xf32> to vector<8x32xf32>
    %44 = vector.extract_strided_slice %42 {offsets = [8, 0], sizes = [8, 32], strides = [1, 1]} : vector<24x32xf32> to vector<8x32xf32>
    %45 = vector.extract_strided_slice %42 {offsets = [16, 0], sizes = [8, 32], strides = [1, 1]} : vector<24x32xf32> to vector<8x32xf32>
    %c1_i32_26 = arith.constant 1 : i32
    %46 = vector.broadcast %c1_i32_26 : i32 to vector<1x32xi32>
    %47 = arith.cmpi sge, %16, %46 : vector<1x32xi32>
    %cst_27 = arith.constant 0.000000e+00 : f32
    %48 = vector.broadcast %cst_27 : f32 to vector<8x1xf32>
    %49 = vector.extract_strided_slice %43 {offsets = [0, 0], sizes = [8, 31], strides = [1, 1]} : vector<8x32xf32> to vector<8x31xf32>
    %50 = tpu.concatenate %48, %49 in 1 : vector<8x1xf32>, vector<8x31xf32> -> vector<8x32xf32>
    %cst_28 = arith.constant 0.000000e+00 : f32
    %51 = vector.shape_cast %47 : vector<1x32xi1> to vector<1x32xi1>
    %52 = vector.broadcast %51 : vector<1x32xi1> to vector<8x32xi1>
    %53 = vector.broadcast %cst_28 : f32 to vector<8x32xf32>
    %54 = arith.select %52, %50, %53 : vector<8x32xi1>, vector<8x32xf32>
    %c15_i32 = arith.constant 15 : i32
    %55 = vector.broadcast %c15_i32 : i32 to vector<1x32xi32>
    %56 = arith.cmpi slt, %16, %55 : vector<1x32xi32>
    %cst_29 = arith.constant 0.000000e+00 : f32
    %57 = vector.broadcast %cst_29 : f32 to vector<8x1xf32>
    %58 = vector.extract_strided_slice %45 {offsets = [0, 1], sizes = [8, 31], strides = [1, 1]} : vector<8x32xf32> to vector<8x31xf32>
    %59 = tpu.concatenate %58, %57 in 1 : vector<8x31xf32>, vector<8x1xf32> -> vector<8x32xf32>
    %cst_30 = arith.constant 0.000000e+00 : f32
    %60 = vector.shape_cast %56 : vector<1x32xi1> to vector<1x32xi1>
    %61 = vector.broadcast %60 : vector<1x32xi1> to vector<8x32xi1>
    %62 = vector.broadcast %cst_30 : f32 to vector<8x32xf32>
    %63 = arith.select %61, %59, %62 : vector<8x32xi1>, vector<8x32xf32>
    %64 = arith.addf %54, %44 : vector<8x32xf32>
    %65 = arith.addf %64, %63 : vector<8x32xf32>
    %c0_31 = arith.constant 0 : index
    %c0_32 = arith.constant 0 : index
    %66 = vector.load %arg5[%c0_31, %c0_32] : memref<16x16xf32, #tpu.memory_space<vmem>>, vector<8x1xf32>
    %67 = vector.broadcast %66 : vector<8x1xf32> to vector<8x32xf32>
    %68 = arith.addf %65, %67 : vector<8x32xf32>
    %cst_33 = arith.constant 0.000000e+00 : f32
    %69 = vector.broadcast %cst_33 : f32 to vector<8x32xf32>
    %70 = arith.maximumf %68, %69 : vector<8x32xf32>
    %c24 = arith.constant 24 : index
    %c0_34 = arith.constant 0 : index
    %71 = vector.load %arg4[%c24, %c0_34] : memref<496x16xbf16, #tpu.memory_space<vmem>>, vector<24x8xbf16>
    %72 = arith.truncf %70 : vector<8x32xf32> to vector<8x32xbf16>
    %cst_35 = arith.constant dense<0.000000e+00> : vector<24x32xf32>
    %73 = tpu.matmul %71, %72, %cst_35 {dimension_numbers = #tpu.dot_dimension_numbers<[1], [0], [0], [1], [0, 0, 1, 1], [], []>} : vector<24x8xbf16>, vector<8x32xbf16>, vector<24x32xf32> -> vector<24x32xf32>
    %74 = vector.extract_strided_slice %73 {offsets = [0, 0], sizes = [8, 32], strides = [1, 1]} : vector<24x32xf32> to vector<8x32xf32>
    %75 = vector.extract_strided_slice %73 {offsets = [8, 0], sizes = [8, 32], strides = [1, 1]} : vector<24x32xf32> to vector<8x32xf32>
    %76 = vector.extract_strided_slice %73 {offsets = [16, 0], sizes = [8, 32], strides = [1, 1]} : vector<24x32xf32> to vector<8x32xf32>
    %c1_i32_36 = arith.constant 1 : i32
    %77 = vector.broadcast %c1_i32_36 : i32 to vector<1x32xi32>
    %78 = arith.cmpi sge, %16, %77 : vector<1x32xi32>
    %cst_37 = arith.constant 0.000000e+00 : f32
    %79 = vector.broadcast %cst_37 : f32 to vector<8x1xf32>
    %80 = vector.extract_strided_slice %74 {offsets = [0, 0], sizes = [8, 31], strides = [1, 1]} : vector<8x32xf32> to vector<8x31xf32>
    %81 = tpu.concatenate %79, %80 in 1 : vector<8x1xf32>, vector<8x31xf32> -> vector<8x32xf32>
    %cst_38 = arith.constant 0.000000e+00 : f32
    %82 = vector.shape_cast %78 : vector<1x32xi1> to vector<1x32xi1>
    %83 = vector.broadcast %82 : vector<1x32xi1> to vector<8x32xi1>
    %84 = vector.broadcast %cst_38 : f32 to vector<8x32xf32>
    %85 = arith.select %83, %81, %84 : vector<8x32xi1>, vector<8x32xf32>
    %c15_i32_39 = arith.constant 15 : i32
    %86 = vector.broadcast %c15_i32_39 : i32 to vector<1x32xi32>
    %87 = arith.cmpi slt, %16, %86 : vector<1x32xi32>
    %cst_40 = arith.constant 0.000000e+00 : f32
    %88 = vector.broadcast %cst_40 : f32 to vector<8x1xf32>
    %89 = vector.extract_strided_slice %76 {offsets = [0, 1], sizes = [8, 31], strides = [1, 1]} : vector<8x32xf32> to vector<8x31xf32>
    %90 = tpu.concatenate %89, %88 in 1 : vector<8x31xf32>, vector<8x1xf32> -> vector<8x32xf32>
    %cst_41 = arith.constant 0.000000e+00 : f32
    %91 = vector.shape_cast %87 : vector<1x32xi1> to vector<1x32xi1>
    %92 = vector.broadcast %91 : vector<1x32xi1> to vector<8x32xi1>
    %93 = vector.broadcast %cst_41 : f32 to vector<8x32xf32>
    %94 = arith.select %92, %90, %93 : vector<8x32xi1>, vector<8x32xf32>
    %95 = arith.addf %85, %75 : vector<8x32xf32>
    %96 = arith.addf %95, %94 : vector<8x32xf32>
    %c0_42 = arith.constant 0 : index
    %c1_43 = arith.constant 1 : index
    %97 = vector.load %arg5[%c0_42, %c1_43] : memref<16x16xf32, #tpu.memory_space<vmem>>, vector<8x1xf32>
    %98 = vector.broadcast %97 : vector<8x1xf32> to vector<8x32xf32>
    %99 = arith.addf %96, %98 : vector<8x32xf32>
    %cst_44 = arith.constant 0.000000e+00 : f32
    %100 = vector.broadcast %cst_44 : f32 to vector<8x1xf32>
    %101 = vector.extract_strided_slice %99 {offsets = [0, 1], sizes = [8, 31], strides = [1, 1]} : vector<8x32xf32> to vector<8x31xf32>
    %102 = tpu.concatenate %101, %100 in 1 : vector<8x31xf32>, vector<8x1xf32> -> vector<8x32xf32>
    %103 = arith.maximumf %99, %102 : vector<8x32xf32>
    %c48 = arith.constant 48 : index
    %c0_45 = arith.constant 0 : index
    %104 = vector.load %arg4[%c48, %c0_45] : memref<496x16xbf16, #tpu.memory_space<vmem>>, vector<48x8xbf16>
    %105 = arith.truncf %103 : vector<8x32xf32> to vector<8x32xbf16>
    %cst_46 = arith.constant dense<0.000000e+00> : vector<48x32xf32>
    %106 = tpu.matmul %104, %105, %cst_46 {dimension_numbers = #tpu.dot_dimension_numbers<[1], [0], [0], [1], [0, 0, 1, 1], [], []>} : vector<48x8xbf16>, vector<8x32xbf16>, vector<48x32xf32> -> vector<48x32xf32>
    %107 = vector.extract_strided_slice %106 {offsets = [0, 0], sizes = [16, 32], strides = [1, 1]} : vector<48x32xf32> to vector<16x32xf32>
    %108 = vector.extract_strided_slice %106 {offsets = [16, 0], sizes = [16, 32], strides = [1, 1]} : vector<48x32xf32> to vector<16x32xf32>
    %109 = vector.extract_strided_slice %106 {offsets = [32, 0], sizes = [16, 32], strides = [1, 1]} : vector<48x32xf32> to vector<16x32xf32>
    %c2_i32 = arith.constant 2 : i32
    %110 = vector.broadcast %c2_i32 : i32 to vector<1x32xi32>
    %111 = arith.cmpi sge, %16, %110 : vector<1x32xi32>
    %cst_47 = arith.constant 0.000000e+00 : f32
    %112 = vector.broadcast %cst_47 : f32 to vector<16x2xf32>
    %113 = vector.extract_strided_slice %107 {offsets = [0, 0], sizes = [16, 30], strides = [1, 1]} : vector<16x32xf32> to vector<16x30xf32>
    %114 = tpu.concatenate %112, %113 in 1 : vector<16x2xf32>, vector<16x30xf32> -> vector<16x32xf32>
    %cst_48 = arith.constant 0.000000e+00 : f32
    %115 = vector.shape_cast %111 : vector<1x32xi1> to vector<1x32xi1>
    %116 = vector.broadcast %115 : vector<1x32xi1> to vector<16x32xi1>
    %117 = vector.broadcast %cst_48 : f32 to vector<16x32xf32>
    %118 = arith.select %116, %114, %117 : vector<16x32xi1>, vector<16x32xf32>
    %c14_i32 = arith.constant 14 : i32
    %119 = vector.broadcast %c14_i32 : i32 to vector<1x32xi32>
    %120 = arith.cmpi slt, %16, %119 : vector<1x32xi32>
    %cst_49 = arith.constant 0.000000e+00 : f32
    %121 = vector.broadcast %cst_49 : f32 to vector<16x2xf32>
    %122 = vector.extract_strided_slice %109 {offsets = [0, 2], sizes = [16, 30], strides = [1, 1]} : vector<16x32xf32> to vector<16x30xf32>
    %123 = tpu.concatenate %122, %121 in 1 : vector<16x30xf32>, vector<16x2xf32> -> vector<16x32xf32>
    %cst_50 = arith.constant 0.000000e+00 : f32
    %124 = vector.shape_cast %120 : vector<1x32xi1> to vector<1x32xi1>
    %125 = vector.broadcast %124 : vector<1x32xi1> to vector<16x32xi1>
    %126 = vector.broadcast %cst_50 : f32 to vector<16x32xf32>
    %127 = arith.select %125, %123, %126 : vector<16x32xi1>, vector<16x32xf32>
    %128 = arith.addf %118, %108 : vector<16x32xf32>
    %129 = arith.addf %128, %127 : vector<16x32xf32>
    %c0_51 = arith.constant 0 : index
    %c2 = arith.constant 2 : index
    %130 = vector.load %arg5[%c0_51, %c2] : memref<16x16xf32, #tpu.memory_space<vmem>>, vector<16x1xf32>
    %131 = vector.broadcast %130 : vector<16x1xf32> to vector<16x32xf32>
    %132 = arith.addf %129, %131 : vector<16x32xf32>
    %cst_52 = arith.constant 0.000000e+00 : f32
    %133 = vector.broadcast %cst_52 : f32 to vector<16x32xf32>
    %134 = arith.maximumf %132, %133 : vector<16x32xf32>
    %c96 = arith.constant 96 : index
    %c0_53 = arith.constant 0 : index
    %135 = vector.load %arg4[%c96, %c0_53] : memref<496x16xbf16, #tpu.memory_space<vmem>>, vector<48x16xbf16>
    %136 = arith.truncf %134 : vector<16x32xf32> to vector<16x32xbf16>
    %cst_54 = arith.constant dense<0.000000e+00> : vector<48x32xf32>
    %137 = tpu.matmul %135, %136, %cst_54 {dimension_numbers = #tpu.dot_dimension_numbers<[1], [0], [0], [1], [0, 0, 1, 1], [], []>} : vector<48x16xbf16>, vector<16x32xbf16>, vector<48x32xf32> -> vector<48x32xf32>
    %138 = vector.extract_strided_slice %137 {offsets = [0, 0], sizes = [16, 32], strides = [1, 1]} : vector<48x32xf32> to vector<16x32xf32>
    %139 = vector.extract_strided_slice %137 {offsets = [16, 0], sizes = [16, 32], strides = [1, 1]} : vector<48x32xf32> to vector<16x32xf32>
    %140 = vector.extract_strided_slice %137 {offsets = [32, 0], sizes = [16, 32], strides = [1, 1]} : vector<48x32xf32> to vector<16x32xf32>
    %c2_i32_55 = arith.constant 2 : i32
    %141 = vector.broadcast %c2_i32_55 : i32 to vector<1x32xi32>
    %142 = arith.cmpi sge, %16, %141 : vector<1x32xi32>
    %cst_56 = arith.constant 0.000000e+00 : f32
    %143 = vector.broadcast %cst_56 : f32 to vector<16x2xf32>
    %144 = vector.extract_strided_slice %138 {offsets = [0, 0], sizes = [16, 30], strides = [1, 1]} : vector<16x32xf32> to vector<16x30xf32>
    %145 = tpu.concatenate %143, %144 in 1 : vector<16x2xf32>, vector<16x30xf32> -> vector<16x32xf32>
    %cst_57 = arith.constant 0.000000e+00 : f32
    %146 = vector.shape_cast %142 : vector<1x32xi1> to vector<1x32xi1>
    %147 = vector.broadcast %146 : vector<1x32xi1> to vector<16x32xi1>
    %148 = vector.broadcast %cst_57 : f32 to vector<16x32xf32>
    %149 = arith.select %147, %145, %148 : vector<16x32xi1>, vector<16x32xf32>
    %c14_i32_58 = arith.constant 14 : i32
    %150 = vector.broadcast %c14_i32_58 : i32 to vector<1x32xi32>
    %151 = arith.cmpi slt, %16, %150 : vector<1x32xi32>
    %cst_59 = arith.constant 0.000000e+00 : f32
    %152 = vector.broadcast %cst_59 : f32 to vector<16x2xf32>
    %153 = vector.extract_strided_slice %140 {offsets = [0, 2], sizes = [16, 30], strides = [1, 1]} : vector<16x32xf32> to vector<16x30xf32>
    %154 = tpu.concatenate %153, %152 in 1 : vector<16x30xf32>, vector<16x2xf32> -> vector<16x32xf32>
    %cst_60 = arith.constant 0.000000e+00 : f32
    %155 = vector.shape_cast %151 : vector<1x32xi1> to vector<1x32xi1>
    %156 = vector.broadcast %155 : vector<1x32xi1> to vector<16x32xi1>
    %157 = vector.broadcast %cst_60 : f32 to vector<16x32xf32>
    %158 = arith.select %156, %154, %157 : vector<16x32xi1>, vector<16x32xf32>
    %159 = arith.addf %149, %139 : vector<16x32xf32>
    %160 = arith.addf %159, %158 : vector<16x32xf32>
    %c0_61 = arith.constant 0 : index
    %c3 = arith.constant 3 : index
    %161 = vector.load %arg5[%c0_61, %c3] : memref<16x16xf32, #tpu.memory_space<vmem>>, vector<16x1xf32>
    %162 = vector.broadcast %161 : vector<16x1xf32> to vector<16x32xf32>
    %163 = arith.addf %160, %162 : vector<16x32xf32>
    %cst_62 = arith.constant 0.000000e+00 : f32
    %164 = vector.broadcast %cst_62 : f32 to vector<16x2xf32>
    %165 = vector.extract_strided_slice %163 {offsets = [0, 2], sizes = [16, 30], strides = [1, 1]} : vector<16x32xf32> to vector<16x30xf32>
    %166 = tpu.concatenate %165, %164 in 1 : vector<16x30xf32>, vector<16x2xf32> -> vector<16x32xf32>
    %167 = arith.maximumf %163, %166 : vector<16x32xf32>
    %c144 = arith.constant 144 : index
    %c0_63 = arith.constant 0 : index
    %168 = vector.load %arg4[%c144, %c0_63] : memref<496x16xbf16, #tpu.memory_space<vmem>>, vector<48x16xbf16>
    %169 = arith.truncf %167 : vector<16x32xf32> to vector<16x32xbf16>
    %cst_64 = arith.constant dense<0.000000e+00> : vector<48x32xf32>
    %170 = tpu.matmul %168, %169, %cst_64 {dimension_numbers = #tpu.dot_dimension_numbers<[1], [0], [0], [1], [0, 0, 1, 1], [], []>} : vector<48x16xbf16>, vector<16x32xbf16>, vector<48x32xf32> -> vector<48x32xf32>
    %171 = vector.extract_strided_slice %170 {offsets = [0, 0], sizes = [16, 32], strides = [1, 1]} : vector<48x32xf32> to vector<16x32xf32>
    %172 = vector.extract_strided_slice %170 {offsets = [16, 0], sizes = [16, 32], strides = [1, 1]} : vector<48x32xf32> to vector<16x32xf32>
    %173 = vector.extract_strided_slice %170 {offsets = [32, 0], sizes = [16, 32], strides = [1, 1]} : vector<48x32xf32> to vector<16x32xf32>
    %c4_i32 = arith.constant 4 : i32
    %174 = vector.broadcast %c4_i32 : i32 to vector<1x32xi32>
    %175 = arith.cmpi sge, %16, %174 : vector<1x32xi32>
    %cst_65 = arith.constant 0.000000e+00 : f32
    %176 = vector.broadcast %cst_65 : f32 to vector<16x4xf32>
    %177 = vector.extract_strided_slice %171 {offsets = [0, 0], sizes = [16, 28], strides = [1, 1]} : vector<16x32xf32> to vector<16x28xf32>
    %178 = tpu.concatenate %176, %177 in 1 : vector<16x4xf32>, vector<16x28xf32> -> vector<16x32xf32>
    %cst_66 = arith.constant 0.000000e+00 : f32
    %179 = vector.shape_cast %175 : vector<1x32xi1> to vector<1x32xi1>
    %180 = vector.broadcast %179 : vector<1x32xi1> to vector<16x32xi1>
    %181 = vector.broadcast %cst_66 : f32 to vector<16x32xf32>
    %182 = arith.select %180, %178, %181 : vector<16x32xi1>, vector<16x32xf32>
    %c12_i32 = arith.constant 12 : i32
    %183 = vector.broadcast %c12_i32 : i32 to vector<1x32xi32>
    %184 = arith.cmpi slt, %16, %183 : vector<1x32xi32>
    %cst_67 = arith.constant 0.000000e+00 : f32
    %185 = vector.broadcast %cst_67 : f32 to vector<16x4xf32>
    %186 = vector.extract_strided_slice %173 {offsets = [0, 4], sizes = [16, 28], strides = [1, 1]} : vector<16x32xf32> to vector<16x28xf32>
    %187 = tpu.concatenate %186, %185 in 1 : vector<16x28xf32>, vector<16x4xf32> -> vector<16x32xf32>
    %cst_68 = arith.constant 0.000000e+00 : f32
    %188 = vector.shape_cast %184 : vector<1x32xi1> to vector<1x32xi1>
    %189 = vector.broadcast %188 : vector<1x32xi1> to vector<16x32xi1>
    %190 = vector.broadcast %cst_68 : f32 to vector<16x32xf32>
    %191 = arith.select %189, %187, %190 : vector<16x32xi1>, vector<16x32xf32>
    %192 = arith.addf %182, %172 : vector<16x32xf32>
    %193 = arith.addf %192, %191 : vector<16x32xf32>
    %c0_69 = arith.constant 0 : index
    %c4 = arith.constant 4 : index
    %194 = vector.load %arg5[%c0_69, %c4] : memref<16x16xf32, #tpu.memory_space<vmem>>, vector<16x1xf32>
    %195 = vector.broadcast %194 : vector<16x1xf32> to vector<16x32xf32>
    %196 = arith.addf %193, %195 : vector<16x32xf32>
    %cst_70 = arith.constant 0.000000e+00 : f32
    %197 = vector.broadcast %cst_70 : f32 to vector<16x32xf32>
    %198 = arith.maximumf %196, %197 : vector<16x32xf32>
    %c192 = arith.constant 192 : index
    %c0_71 = arith.constant 0 : index
    %199 = vector.load %arg4[%c192, %c0_71] : memref<496x16xbf16, #tpu.memory_space<vmem>>, vector<48x16xbf16>
    %200 = arith.truncf %198 : vector<16x32xf32> to vector<16x32xbf16>
    %cst_72 = arith.constant dense<0.000000e+00> : vector<48x32xf32>
    %201 = tpu.matmul %199, %200, %cst_72 {dimension_numbers = #tpu.dot_dimension_numbers<[1], [0], [0], [1], [0, 0, 1, 1], [], []>} : vector<48x16xbf16>, vector<16x32xbf16>, vector<48x32xf32> -> vector<48x32xf32>
    %202 = vector.extract_strided_slice %201 {offsets = [0, 0], sizes = [16, 32], strides = [1, 1]} : vector<48x32xf32> to vector<16x32xf32>
    %203 = vector.extract_strided_slice %201 {offsets = [16, 0], sizes = [16, 32], strides = [1, 1]} : vector<48x32xf32> to vector<16x32xf32>
    %204 = vector.extract_strided_slice %201 {offsets = [32, 0], sizes = [16, 32], strides = [1, 1]} : vector<48x32xf32> to vector<16x32xf32>
    %c4_i32_73 = arith.constant 4 : i32
    %205 = vector.broadcast %c4_i32_73 : i32 to vector<1x32xi32>
    %206 = arith.cmpi sge, %16, %205 : vector<1x32xi32>
    %cst_74 = arith.constant 0.000000e+00 : f32
    %207 = vector.broadcast %cst_74 : f32 to vector<16x4xf32>
    %208 = vector.extract_strided_slice %202 {offsets = [0, 0], sizes = [16, 28], strides = [1, 1]} : vector<16x32xf32> to vector<16x28xf32>
    %209 = tpu.concatenate %207, %208 in 1 : vector<16x4xf32>, vector<16x28xf32> -> vector<16x32xf32>
    %cst_75 = arith.constant 0.000000e+00 : f32
    %210 = vector.shape_cast %206 : vector<1x32xi1> to vector<1x32xi1>
    %211 = vector.broadcast %210 : vector<1x32xi1> to vector<16x32xi1>
    %212 = vector.broadcast %cst_75 : f32 to vector<16x32xf32>
    %213 = arith.select %211, %209, %212 : vector<16x32xi1>, vector<16x32xf32>
    %c12_i32_76 = arith.constant 12 : i32
    %214 = vector.broadcast %c12_i32_76 : i32 to vector<1x32xi32>
    %215 = arith.cmpi slt, %16, %214 : vector<1x32xi32>
    %cst_77 = arith.constant 0.000000e+00 : f32
    %216 = vector.broadcast %cst_77 : f32 to vector<16x4xf32>
    %217 = vector.extract_strided_slice %204 {offsets = [0, 4], sizes = [16, 28], strides = [1, 1]} : vector<16x32xf32> to vector<16x28xf32>
    %218 = tpu.concatenate %217, %216 in 1 : vector<16x28xf32>, vector<16x4xf32> -> vector<16x32xf32>
    %cst_78 = arith.constant 0.000000e+00 : f32
    %219 = vector.shape_cast %215 : vector<1x32xi1> to vector<1x32xi1>
    %220 = vector.broadcast %219 : vector<1x32xi1> to vector<16x32xi1>
    %221 = vector.broadcast %cst_78 : f32 to vector<16x32xf32>
    %222 = arith.select %220, %218, %221 : vector<16x32xi1>, vector<16x32xf32>
    %223 = arith.addf %213, %203 : vector<16x32xf32>
    %224 = arith.addf %223, %222 : vector<16x32xf32>
    %c0_79 = arith.constant 0 : index
    %c5 = arith.constant 5 : index
    %225 = vector.load %arg5[%c0_79, %c5] : memref<16x16xf32, #tpu.memory_space<vmem>>, vector<16x1xf32>
    %226 = vector.broadcast %225 : vector<16x1xf32> to vector<16x32xf32>
    %227 = arith.addf %224, %226 : vector<16x32xf32>
    %cst_80 = arith.constant 0.000000e+00 : f32
    %228 = vector.broadcast %cst_80 : f32 to vector<16x4xf32>
    %229 = vector.extract_strided_slice %227 {offsets = [0, 4], sizes = [16, 28], strides = [1, 1]} : vector<16x32xf32> to vector<16x28xf32>
    %230 = tpu.concatenate %229, %228 in 1 : vector<16x28xf32>, vector<16x4xf32> -> vector<16x32xf32>
    %231 = arith.maximumf %227, %230 : vector<16x32xf32>
    %c240 = arith.constant 240 : index
    %c0_81 = arith.constant 0 : index
    %232 = vector.load %arg4[%c240, %c0_81] : memref<496x16xbf16, #tpu.memory_space<vmem>>, vector<48x16xbf16>
    %233 = arith.truncf %231 : vector<16x32xf32> to vector<16x32xbf16>
    %cst_82 = arith.constant dense<0.000000e+00> : vector<48x32xf32>
    %234 = tpu.matmul %232, %233, %cst_82 {dimension_numbers = #tpu.dot_dimension_numbers<[1], [0], [0], [1], [0, 0, 1, 1], [], []>} : vector<48x16xbf16>, vector<16x32xbf16>, vector<48x32xf32> -> vector<48x32xf32>
    %235 = vector.extract_strided_slice %234 {offsets = [0, 0], sizes = [16, 32], strides = [1, 1]} : vector<48x32xf32> to vector<16x32xf32>
    %236 = vector.extract_strided_slice %234 {offsets = [16, 0], sizes = [16, 32], strides = [1, 1]} : vector<48x32xf32> to vector<16x32xf32>
    %237 = vector.extract_strided_slice %234 {offsets = [32, 0], sizes = [16, 32], strides = [1, 1]} : vector<48x32xf32> to vector<16x32xf32>
    %c8_i32 = arith.constant 8 : i32
    %238 = vector.broadcast %c8_i32 : i32 to vector<1x32xi32>
    %239 = arith.cmpi sge, %16, %238 : vector<1x32xi32>
    %cst_83 = arith.constant 0.000000e+00 : f32
    %240 = vector.broadcast %cst_83 : f32 to vector<16x8xf32>
    %241 = vector.extract_strided_slice %235 {offsets = [0, 0], sizes = [16, 24], strides = [1, 1]} : vector<16x32xf32> to vector<16x24xf32>
    %242 = tpu.concatenate %240, %241 in 1 : vector<16x8xf32>, vector<16x24xf32> -> vector<16x32xf32>
    %cst_84 = arith.constant 0.000000e+00 : f32
    %243 = vector.shape_cast %239 : vector<1x32xi1> to vector<1x32xi1>
    %244 = vector.broadcast %243 : vector<1x32xi1> to vector<16x32xi1>
    %245 = vector.broadcast %cst_84 : f32 to vector<16x32xf32>
    %246 = arith.select %244, %242, %245 : vector<16x32xi1>, vector<16x32xf32>
    %c8_i32_85 = arith.constant 8 : i32
    %247 = vector.broadcast %c8_i32_85 : i32 to vector<1x32xi32>
    %248 = arith.cmpi slt, %16, %247 : vector<1x32xi32>
    %cst_86 = arith.constant 0.000000e+00 : f32
    %249 = vector.broadcast %cst_86 : f32 to vector<16x8xf32>
    %250 = vector.extract_strided_slice %237 {offsets = [0, 8], sizes = [16, 24], strides = [1, 1]} : vector<16x32xf32> to vector<16x24xf32>
    %251 = tpu.concatenate %250, %249 in 1 : vector<16x24xf32>, vector<16x8xf32> -> vector<16x32xf32>
    %cst_87 = arith.constant 0.000000e+00 : f32
    %252 = vector.shape_cast %248 : vector<1x32xi1> to vector<1x32xi1>
    %253 = vector.broadcast %252 : vector<1x32xi1> to vector<16x32xi1>
    %254 = vector.broadcast %cst_87 : f32 to vector<16x32xf32>
    %255 = arith.select %253, %251, %254 : vector<16x32xi1>, vector<16x32xf32>
    %256 = arith.addf %246, %236 : vector<16x32xf32>
    %257 = arith.addf %256, %255 : vector<16x32xf32>
    %c0_88 = arith.constant 0 : index
    %c6 = arith.constant 6 : index
    %258 = vector.load %arg5[%c0_88, %c6] : memref<16x16xf32, #tpu.memory_space<vmem>>, vector<16x1xf32>
    %259 = vector.broadcast %258 : vector<16x1xf32> to vector<16x32xf32>
    %260 = arith.addf %257, %259 : vector<16x32xf32>
    %cst_89 = arith.constant 0.000000e+00 : f32
    %261 = vector.broadcast %cst_89 : f32 to vector<16x32xf32>
    %262 = arith.maximumf %260, %261 : vector<16x32xf32>
    %c288 = arith.constant 288 : index
    %c0_90 = arith.constant 0 : index
    %263 = vector.load %arg4[%c288, %c0_90] : memref<496x16xbf16, #tpu.memory_space<vmem>>, vector<48x16xbf16>
    %264 = arith.truncf %262 : vector<16x32xf32> to vector<16x32xbf16>
    %cst_91 = arith.constant dense<0.000000e+00> : vector<48x32xf32>
    %265 = tpu.matmul %263, %264, %cst_91 {dimension_numbers = #tpu.dot_dimension_numbers<[1], [0], [0], [1], [0, 0, 1, 1], [], []>} : vector<48x16xbf16>, vector<16x32xbf16>, vector<48x32xf32> -> vector<48x32xf32>
    %266 = vector.extract_strided_slice %265 {offsets = [0, 0], sizes = [16, 32], strides = [1, 1]} : vector<48x32xf32> to vector<16x32xf32>
    %267 = vector.extract_strided_slice %265 {offsets = [16, 0], sizes = [16, 32], strides = [1, 1]} : vector<48x32xf32> to vector<16x32xf32>
    %268 = vector.extract_strided_slice %265 {offsets = [32, 0], sizes = [16, 32], strides = [1, 1]} : vector<48x32xf32> to vector<16x32xf32>
    %c8_i32_92 = arith.constant 8 : i32
    %269 = vector.broadcast %c8_i32_92 : i32 to vector<1x32xi32>
    %270 = arith.cmpi sge, %16, %269 : vector<1x32xi32>
    %cst_93 = arith.constant 0.000000e+00 : f32
    %271 = vector.broadcast %cst_93 : f32 to vector<16x8xf32>
    %272 = vector.extract_strided_slice %266 {offsets = [0, 0], sizes = [16, 24], strides = [1, 1]} : vector<16x32xf32> to vector<16x24xf32>
    %273 = tpu.concatenate %271, %272 in 1 : vector<16x8xf32>, vector<16x24xf32> -> vector<16x32xf32>
    %cst_94 = arith.constant 0.000000e+00 : f32
    %274 = vector.shape_cast %270 : vector<1x32xi1> to vector<1x32xi1>
    %275 = vector.broadcast %274 : vector<1x32xi1> to vector<16x32xi1>
    %276 = vector.broadcast %cst_94 : f32 to vector<16x32xf32>
    %277 = arith.select %275, %273, %276 : vector<16x32xi1>, vector<16x32xf32>
    %c8_i32_95 = arith.constant 8 : i32
    %278 = vector.broadcast %c8_i32_95 : i32 to vector<1x32xi32>
    %279 = arith.cmpi slt, %16, %278 : vector<1x32xi32>
    %cst_96 = arith.constant 0.000000e+00 : f32
    %280 = vector.broadcast %cst_96 : f32 to vector<16x8xf32>
    %281 = vector.extract_strided_slice %268 {offsets = [0, 8], sizes = [16, 24], strides = [1, 1]} : vector<16x32xf32> to vector<16x24xf32>
    %282 = tpu.concatenate %281, %280 in 1 : vector<16x24xf32>, vector<16x8xf32> -> vector<16x32xf32>
    %cst_97 = arith.constant 0.000000e+00 : f32
    %283 = vector.shape_cast %279 : vector<1x32xi1> to vector<1x32xi1>
    %284 = vector.broadcast %283 : vector<1x32xi1> to vector<16x32xi1>
    %285 = vector.broadcast %cst_97 : f32 to vector<16x32xf32>
    %286 = arith.select %284, %282, %285 : vector<16x32xi1>, vector<16x32xf32>
    %287 = arith.addf %277, %267 : vector<16x32xf32>
    %288 = arith.addf %287, %286 : vector<16x32xf32>
    %c0_98 = arith.constant 0 : index
    %c7 = arith.constant 7 : index
    %289 = vector.load %arg5[%c0_98, %c7] : memref<16x16xf32, #tpu.memory_space<vmem>>, vector<16x1xf32>
    %290 = vector.broadcast %289 : vector<16x1xf32> to vector<16x32xf32>
    %291 = arith.addf %288, %290 : vector<16x32xf32>
    %292 = arith.addf %291, %231 : vector<16x32xf32>
    %c336 = arith.constant 336 : index
    %c0_99 = arith.constant 0 : index
    %293 = vector.load %arg4[%c336, %c0_99] : memref<496x16xbf16, #tpu.memory_space<vmem>>, vector<32x16xbf16>
    %294 = arith.truncf %292 : vector<16x32xf32> to vector<16x32xbf16>
    %cst_100 = arith.constant dense<0.000000e+00> : vector<32x32xf32>
    %295 = tpu.matmul %293, %294, %cst_100 {dimension_numbers = #tpu.dot_dimension_numbers<[1], [0], [0], [1], [0, 0, 1, 1], [], []>} : vector<32x16xbf16>, vector<16x32xbf16>, vector<32x32xf32> -> vector<32x32xf32>
    %296 = vector.extract_strided_slice %295 {offsets = [0, 0], sizes = [16, 32], strides = [1, 1]} : vector<32x32xf32> to vector<16x32xf32>
    %297 = vector.extract_strided_slice %295 {offsets = [16, 0], sizes = [16, 32], strides = [1, 1]} : vector<32x32xf32> to vector<16x32xf32>
    %c8_i32_101 = arith.constant 8 : i32
    %c0_i32_102 = arith.constant 0 : i32
    %298 = arith.cmpi eq, %c8_i32_101, %c0_i32_102 : i32
    %c1_i32_103 = arith.constant 1 : i32
    %299 = arith.select %298, %c1_i32_103, %c8_i32_101 : i32
    %300 = vector.broadcast %299 : i32 to vector<1x32xi32>
    %301 = arith.remsi %0, %300 : vector<1x32xi32>
    %c0_i32_104 = arith.constant 0 : i32
    %302 = vector.broadcast %c0_i32_104 : i32 to vector<1x32xi32>
    %303 = arith.cmpi ne, %301, %302 : vector<1x32xi32>
    %c0_i32_105 = arith.constant 0 : i32
    %304 = vector.broadcast %c0_i32_105 : i32 to vector<1x32xi32>
    %305 = arith.cmpi slt, %301, %304 : vector<1x32xi32>
    %c0_i32_106 = arith.constant 0 : i32
    %306 = arith.cmpi slt, %299, %c0_i32_106 : i32
    %307 = vector.broadcast %306 : i1 to vector<1x32xi1>
    %308 = vector.broadcast %307 : vector<1x32xi1> to vector<1x32xi1>
    %309 = arith.xori %305, %308 : vector<1x32xi1>
    %310 = arith.andi %309, %303 : vector<1x32xi1>
    %311 = vector.broadcast %299 : i32 to vector<1x32xi32>
    %312 = arith.addi %301, %311 : vector<1x32xi32>
    %313 = arith.select %310, %312, %301 : vector<1x32xi1>, vector<1x32xi32>
    %c0_i32_107 = arith.constant 0 : i32
    %314 = vector.broadcast %c0_i32_107 : i32 to vector<1x32xi32>
    %315 = arith.cmpi eq, %313, %314 : vector<1x32xi32>
    %cst_108 = arith.constant 0.000000e+00 : f32
    %316 = vector.broadcast %cst_108 : f32 to vector<16x4xf32>
    %317 = vector.extract_strided_slice %297 {offsets = [0, 0], sizes = [16, 28], strides = [1, 1]} : vector<16x32xf32> to vector<16x28xf32>
    %318 = tpu.concatenate %316, %317 in 1 : vector<16x4xf32>, vector<16x28xf32> -> vector<16x32xf32>
    %319 = vector.shape_cast %315 : vector<1x32xi1> to vector<1x32xi1>
    %320 = vector.broadcast %319 : vector<1x32xi1> to vector<16x32xi1>
    %321 = arith.select %320, %296, %318 : vector<16x32xi1>, vector<16x32xf32>
    %c0_109 = arith.constant 0 : index
    %c8 = arith.constant 8 : index
    %322 = vector.load %arg5[%c0_109, %c8] : memref<16x16xf32, #tpu.memory_space<vmem>>, vector<16x1xf32>
    %323 = vector.broadcast %322 : vector<16x1xf32> to vector<16x32xf32>
    %324 = arith.addf %321, %323 : vector<16x32xf32>
    %cst_110 = arith.constant 0.000000e+00 : f32
    %325 = vector.broadcast %cst_110 : f32 to vector<16x32xf32>
    %326 = arith.maximumf %324, %325 : vector<16x32xf32>
    %c368 = arith.constant 368 : index
    %c0_111 = arith.constant 0 : index
    %327 = vector.load %arg4[%c368, %c0_111] : memref<496x16xbf16, #tpu.memory_space<vmem>>, vector<48x16xbf16>
    %328 = arith.truncf %326 : vector<16x32xf32> to vector<16x32xbf16>
    %cst_112 = arith.constant dense<0.000000e+00> : vector<48x32xf32>
    %329 = tpu.matmul %327, %328, %cst_112 {dimension_numbers = #tpu.dot_dimension_numbers<[1], [0], [0], [1], [0, 0, 1, 1], [], []>} : vector<48x16xbf16>, vector<16x32xbf16>, vector<48x32xf32> -> vector<48x32xf32>
    %330 = vector.extract_strided_slice %329 {offsets = [0, 0], sizes = [16, 32], strides = [1, 1]} : vector<48x32xf32> to vector<16x32xf32>
    %331 = vector.extract_strided_slice %329 {offsets = [16, 0], sizes = [16, 32], strides = [1, 1]} : vector<48x32xf32> to vector<16x32xf32>
    %332 = vector.extract_strided_slice %329 {offsets = [32, 0], sizes = [16, 32], strides = [1, 1]} : vector<48x32xf32> to vector<16x32xf32>
    %c4_i32_113 = arith.constant 4 : i32
    %333 = vector.broadcast %c4_i32_113 : i32 to vector<1x32xi32>
    %334 = arith.cmpi sge, %16, %333 : vector<1x32xi32>
    %cst_114 = arith.constant 0.000000e+00 : f32
    %335 = vector.broadcast %cst_114 : f32 to vector<16x4xf32>
    %336 = vector.extract_strided_slice %330 {offsets = [0, 0], sizes = [16, 28], strides = [1, 1]} : vector<16x32xf32> to vector<16x28xf32>
    %337 = tpu.concatenate %335, %336 in 1 : vector<16x4xf32>, vector<16x28xf32> -> vector<16x32xf32>
    %cst_115 = arith.constant 0.000000e+00 : f32
    %338 = vector.shape_cast %334 : vector<1x32xi1> to vector<1x32xi1>
    %339 = vector.broadcast %338 : vector<1x32xi1> to vector<16x32xi1>
    %340 = vector.broadcast %cst_115 : f32 to vector<16x32xf32>
    %341 = arith.select %339, %337, %340 : vector<16x32xi1>, vector<16x32xf32>
    %c12_i32_116 = arith.constant 12 : i32
    %342 = vector.broadcast %c12_i32_116 : i32 to vector<1x32xi32>
    %343 = arith.cmpi slt, %16, %342 : vector<1x32xi32>
    %cst_117 = arith.constant 0.000000e+00 : f32
    %344 = vector.broadcast %cst_117 : f32 to vector<16x4xf32>
    %345 = vector.extract_strided_slice %332 {offsets = [0, 4], sizes = [16, 28], strides = [1, 1]} : vector<16x32xf32> to vector<16x28xf32>
    %346 = tpu.concatenate %345, %344 in 1 : vector<16x28xf32>, vector<16x4xf32> -> vector<16x32xf32>
    %cst_118 = arith.constant 0.000000e+00 : f32
    %347 = vector.shape_cast %343 : vector<1x32xi1> to vector<1x32xi1>
    %348 = vector.broadcast %347 : vector<1x32xi1> to vector<16x32xi1>
    %349 = vector.broadcast %cst_118 : f32 to vector<16x32xf32>
    %350 = arith.select %348, %346, %349 : vector<16x32xi1>, vector<16x32xf32>
    %351 = arith.addf %341, %331 : vector<16x32xf32>
    %352 = arith.addf %351, %350 : vector<16x32xf32>
    %c0_119 = arith.constant 0 : index
    %c9 = arith.constant 9 : index
    %353 = vector.load %arg5[%c0_119, %c9] : memref<16x16xf32, #tpu.memory_space<vmem>>, vector<16x1xf32>
    %354 = vector.broadcast %353 : vector<16x1xf32> to vector<16x32xf32>
    %355 = arith.addf %352, %354 : vector<16x32xf32>
    %356 = arith.addf %355, %167 : vector<16x32xf32>
    %c416 = arith.constant 416 : index
    %c0_120 = arith.constant 0 : index
    %357 = vector.load %arg4[%c416, %c0_120] : memref<496x16xbf16, #tpu.memory_space<vmem>>, vector<16x16xbf16>
    %358 = arith.truncf %356 : vector<16x32xf32> to vector<16x32xbf16>
    %cst_121 = arith.constant dense<0.000000e+00> : vector<16x32xf32>
    %359 = tpu.matmul %357, %358, %cst_121 {dimension_numbers = #tpu.dot_dimension_numbers<[1], [0], [0], [1], [0, 0, 1, 1], [], []>} : vector<16x16xbf16>, vector<16x32xbf16>, vector<16x32xf32> -> vector<16x32xf32>
    %360 = vector.extract_strided_slice %359 {offsets = [0, 0], sizes = [8, 32], strides = [1, 1]} : vector<16x32xf32> to vector<8x32xf32>
    %361 = vector.extract_strided_slice %359 {offsets = [8, 0], sizes = [8, 32], strides = [1, 1]} : vector<16x32xf32> to vector<8x32xf32>
    %c4_i32_122 = arith.constant 4 : i32
    %c0_i32_123 = arith.constant 0 : i32
    %362 = arith.cmpi eq, %c4_i32_122, %c0_i32_123 : i32
    %c1_i32_124 = arith.constant 1 : i32
    %363 = arith.select %362, %c1_i32_124, %c4_i32_122 : i32
    %364 = vector.broadcast %363 : i32 to vector<1x32xi32>
    %365 = arith.remsi %0, %364 : vector<1x32xi32>
    %c0_i32_125 = arith.constant 0 : i32
    %366 = vector.broadcast %c0_i32_125 : i32 to vector<1x32xi32>
    %367 = arith.cmpi ne, %365, %366 : vector<1x32xi32>
    %c0_i32_126 = arith.constant 0 : i32
    %368 = vector.broadcast %c0_i32_126 : i32 to vector<1x32xi32>
    %369 = arith.cmpi slt, %365, %368 : vector<1x32xi32>
    %c0_i32_127 = arith.constant 0 : i32
    %370 = arith.cmpi slt, %363, %c0_i32_127 : i32
    %371 = vector.broadcast %370 : i1 to vector<1x32xi1>
    %372 = vector.broadcast %371 : vector<1x32xi1> to vector<1x32xi1>
    %373 = arith.xori %369, %372 : vector<1x32xi1>
    %374 = arith.andi %373, %367 : vector<1x32xi1>
    %375 = vector.broadcast %363 : i32 to vector<1x32xi32>
    %376 = arith.addi %365, %375 : vector<1x32xi32>
    %377 = arith.select %374, %376, %365 : vector<1x32xi1>, vector<1x32xi32>
    %c0_i32_128 = arith.constant 0 : i32
    %378 = vector.broadcast %c0_i32_128 : i32 to vector<1x32xi32>
    %379 = arith.cmpi eq, %377, %378 : vector<1x32xi32>
    %cst_129 = arith.constant 0.000000e+00 : f32
    %380 = vector.broadcast %cst_129 : f32 to vector<8x2xf32>
    %381 = vector.extract_strided_slice %361 {offsets = [0, 0], sizes = [8, 30], strides = [1, 1]} : vector<8x32xf32> to vector<8x30xf32>
    %382 = tpu.concatenate %380, %381 in 1 : vector<8x2xf32>, vector<8x30xf32> -> vector<8x32xf32>
    %383 = vector.shape_cast %379 : vector<1x32xi1> to vector<1x32xi1>
    %384 = vector.broadcast %383 : vector<1x32xi1> to vector<8x32xi1>
    %385 = arith.select %384, %360, %382 : vector<8x32xi1>, vector<8x32xf32>
    %c0_130 = arith.constant 0 : index
    %c10 = arith.constant 10 : index
    %386 = vector.load %arg5[%c0_130, %c10] : memref<16x16xf32, #tpu.memory_space<vmem>>, vector<8x1xf32>
    %387 = vector.broadcast %386 : vector<8x1xf32> to vector<8x32xf32>
    %388 = arith.addf %385, %387 : vector<8x32xf32>
    %cst_131 = arith.constant 0.000000e+00 : f32
    %389 = vector.broadcast %cst_131 : f32 to vector<8x32xf32>
    %390 = arith.maximumf %388, %389 : vector<8x32xf32>
    %c432 = arith.constant 432 : index
    %c0_132 = arith.constant 0 : index
    %391 = vector.load %arg4[%c432, %c0_132] : memref<496x16xbf16, #tpu.memory_space<vmem>>, vector<24x8xbf16>
    %392 = arith.truncf %390 : vector<8x32xf32> to vector<8x32xbf16>
    %cst_133 = arith.constant dense<0.000000e+00> : vector<24x32xf32>
    %393 = tpu.matmul %391, %392, %cst_133 {dimension_numbers = #tpu.dot_dimension_numbers<[1], [0], [0], [1], [0, 0, 1, 1], [], []>} : vector<24x8xbf16>, vector<8x32xbf16>, vector<24x32xf32> -> vector<24x32xf32>
    %394 = vector.extract_strided_slice %393 {offsets = [0, 0], sizes = [8, 32], strides = [1, 1]} : vector<24x32xf32> to vector<8x32xf32>
    %395 = vector.extract_strided_slice %393 {offsets = [8, 0], sizes = [8, 32], strides = [1, 1]} : vector<24x32xf32> to vector<8x32xf32>
    %396 = vector.extract_strided_slice %393 {offsets = [16, 0], sizes = [8, 32], strides = [1, 1]} : vector<24x32xf32> to vector<8x32xf32>
    %c2_i32_134 = arith.constant 2 : i32
    %397 = vector.broadcast %c2_i32_134 : i32 to vector<1x32xi32>
    %398 = arith.cmpi sge, %16, %397 : vector<1x32xi32>
    %cst_135 = arith.constant 0.000000e+00 : f32
    %399 = vector.broadcast %cst_135 : f32 to vector<8x2xf32>
    %400 = vector.extract_strided_slice %394 {offsets = [0, 0], sizes = [8, 30], strides = [1, 1]} : vector<8x32xf32> to vector<8x30xf32>
    %401 = tpu.concatenate %399, %400 in 1 : vector<8x2xf32>, vector<8x30xf32> -> vector<8x32xf32>
    %cst_136 = arith.constant 0.000000e+00 : f32
    %402 = vector.shape_cast %398 : vector<1x32xi1> to vector<1x32xi1>
    %403 = vector.broadcast %402 : vector<1x32xi1> to vector<8x32xi1>
    %404 = vector.broadcast %cst_136 : f32 to vector<8x32xf32>
    %405 = arith.select %403, %401, %404 : vector<8x32xi1>, vector<8x32xf32>
    %c14_i32_137 = arith.constant 14 : i32
    %406 = vector.broadcast %c14_i32_137 : i32 to vector<1x32xi32>
    %407 = arith.cmpi slt, %16, %406 : vector<1x32xi32>
    %cst_138 = arith.constant 0.000000e+00 : f32
    %408 = vector.broadcast %cst_138 : f32 to vector<8x2xf32>
    %409 = vector.extract_strided_slice %396 {offsets = [0, 2], sizes = [8, 30], strides = [1, 1]} : vector<8x32xf32> to vector<8x30xf32>
    %410 = tpu.concatenate %409, %408 in 1 : vector<8x30xf32>, vector<8x2xf32> -> vector<8x32xf32>
    %cst_139 = arith.constant 0.000000e+00 : f32
    %411 = vector.shape_cast %407 : vector<1x32xi1> to vector<1x32xi1>
    %412 = vector.broadcast %411 : vector<1x32xi1> to vector<8x32xi1>
    %413 = vector.broadcast %cst_139 : f32 to vector<8x32xf32>
    %414 = arith.select %412, %410, %413 : vector<8x32xi1>, vector<8x32xf32>
    %415 = arith.addf %405, %395 : vector<8x32xf32>
    %416 = arith.addf %415, %414 : vector<8x32xf32>
    %c0_140 = arith.constant 0 : index
    %c11 = arith.constant 11 : index
    %417 = vector.load %arg5[%c0_140, %c11] : memref<16x16xf32, #tpu.memory_space<vmem>>, vector<8x1xf32>
    %418 = vector.broadcast %417 : vector<8x1xf32> to vector<8x32xf32>
    %419 = arith.addf %416, %418 : vector<8x32xf32>
    %420 = arith.addf %419, %103 : vector<8x32xf32>
    %c456 = arith.constant 456 : index
    %c0_141 = arith.constant 0 : index
    %421 = vector.load %arg4[%c456, %c0_141] : memref<496x16xbf16, #tpu.memory_space<vmem>>, vector<16x8xbf16>
    %422 = arith.truncf %420 : vector<8x32xf32> to vector<8x32xbf16>
    %cst_142 = arith.constant dense<0.000000e+00> : vector<16x32xf32>
    %423 = tpu.matmul %421, %422, %cst_142 {dimension_numbers = #tpu.dot_dimension_numbers<[1], [0], [0], [1], [0, 0, 1, 1], [], []>} : vector<16x8xbf16>, vector<8x32xbf16>, vector<16x32xf32> -> vector<16x32xf32>
    %424 = vector.extract_strided_slice %423 {offsets = [0, 0], sizes = [1, 32], strides = [1, 1]} : vector<16x32xf32> to vector<1x32xf32>
    %425 = vector.extract_strided_slice %423 {offsets = [8, 0], sizes = [1, 32], strides = [1, 1]} : vector<16x32xf32> to vector<1x32xf32>
    %c2_i32_143 = arith.constant 2 : i32
    %c0_i32_144 = arith.constant 0 : i32
    %426 = arith.cmpi eq, %c2_i32_143, %c0_i32_144 : i32
    %c1_i32_145 = arith.constant 1 : i32
    %427 = arith.select %426, %c1_i32_145, %c2_i32_143 : i32
    %428 = vector.broadcast %427 : i32 to vector<1x32xi32>
    %429 = arith.remsi %0, %428 : vector<1x32xi32>
    %c0_i32_146 = arith.constant 0 : i32
    %430 = vector.broadcast %c0_i32_146 : i32 to vector<1x32xi32>
    %431 = arith.cmpi ne, %429, %430 : vector<1x32xi32>
    %c0_i32_147 = arith.constant 0 : i32
    %432 = vector.broadcast %c0_i32_147 : i32 to vector<1x32xi32>
    %433 = arith.cmpi slt, %429, %432 : vector<1x32xi32>
    %c0_i32_148 = arith.constant 0 : i32
    %434 = arith.cmpi slt, %427, %c0_i32_148 : i32
    %435 = vector.broadcast %434 : i1 to vector<1x32xi1>
    %436 = vector.broadcast %435 : vector<1x32xi1> to vector<1x32xi1>
    %437 = arith.xori %433, %436 : vector<1x32xi1>
    %438 = arith.andi %437, %431 : vector<1x32xi1>
    %439 = vector.broadcast %427 : i32 to vector<1x32xi32>
    %440 = arith.addi %429, %439 : vector<1x32xi32>
    %441 = arith.select %438, %440, %429 : vector<1x32xi1>, vector<1x32xi32>
    %c0_i32_149 = arith.constant 0 : i32
    %442 = vector.broadcast %c0_i32_149 : i32 to vector<1x32xi32>
    %443 = arith.cmpi eq, %441, %442 : vector<1x32xi32>
    %cst_150 = arith.constant 0.000000e+00 : f32
    %444 = vector.broadcast %cst_150 : f32 to vector<1x1xf32>
    %445 = vector.extract_strided_slice %425 {offsets = [0, 0], sizes = [1, 31], strides = [1, 1]} : vector<1x32xf32> to vector<1x31xf32>
    %446 = tpu.concatenate %444, %445 in 1 : vector<1x1xf32>, vector<1x31xf32> -> vector<1x32xf32>
    %447 = arith.select %443, %424, %446 : vector<1x32xi1>, vector<1x32xf32>
    %c0_151 = arith.constant 0 : index
    %c12 = arith.constant 12 : index
    %448 = vector.load %arg5[%c0_151, %c12] : memref<16x16xf32, #tpu.memory_space<vmem>>, vector<1x1xf32>
    %449 = vector.broadcast %448 : vector<1x1xf32> to vector<1x32xf32>
    %450 = arith.addf %447, %449 : vector<1x32xf32>
    %cst_152 = arith.constant 0.000000e+00 : f32
    %451 = vector.broadcast %cst_152 : f32 to vector<1x32xf32>
    %452 = arith.maximumf %450, %451 : vector<1x32xf32>
    %c472 = arith.constant 472 : index
    %c0_153 = arith.constant 0 : index
    %453 = vector.load %arg4[%c472, %c0_153] : memref<496x16xbf16, #tpu.memory_space<vmem>>, vector<24x1xbf16>
    %454 = arith.truncf %452 : vector<1x32xf32> to vector<1x32xbf16>
    %cst_154 = arith.constant dense<0.000000e+00> : vector<24x32xf32>
    %455 = tpu.matmul %453, %454, %cst_154 {dimension_numbers = #tpu.dot_dimension_numbers<[1], [0], [0], [1], [0, 0, 1, 1], [], []>} : vector<24x1xbf16>, vector<1x32xbf16>, vector<24x32xf32> -> vector<24x32xf32>
    %456 = vector.extract_strided_slice %455 {offsets = [0, 0], sizes = [1, 32], strides = [1, 1]} : vector<24x32xf32> to vector<1x32xf32>
    %457 = vector.extract_strided_slice %455 {offsets = [8, 0], sizes = [1, 32], strides = [1, 1]} : vector<24x32xf32> to vector<1x32xf32>
    %458 = vector.extract_strided_slice %455 {offsets = [16, 0], sizes = [1, 32], strides = [1, 1]} : vector<24x32xf32> to vector<1x32xf32>
    %c1_i32_155 = arith.constant 1 : i32
    %459 = vector.broadcast %c1_i32_155 : i32 to vector<1x32xi32>
    %460 = arith.cmpi sge, %16, %459 : vector<1x32xi32>
    %cst_156 = arith.constant 0.000000e+00 : f32
    %461 = vector.broadcast %cst_156 : f32 to vector<1x1xf32>
    %462 = vector.extract_strided_slice %456 {offsets = [0, 0], sizes = [1, 31], strides = [1, 1]} : vector<1x32xf32> to vector<1x31xf32>
    %463 = tpu.concatenate %461, %462 in 1 : vector<1x1xf32>, vector<1x31xf32> -> vector<1x32xf32>
    %cst_157 = arith.constant 0.000000e+00 : f32
    %464 = vector.broadcast %cst_157 : f32 to vector<1x32xf32>
    %465 = arith.select %460, %463, %464 : vector<1x32xi1>, vector<1x32xf32>
    %c15_i32_158 = arith.constant 15 : i32
    %466 = vector.broadcast %c15_i32_158 : i32 to vector<1x32xi32>
    %467 = arith.cmpi slt, %16, %466 : vector<1x32xi32>
    %cst_159 = arith.constant 0.000000e+00 : f32
    %468 = vector.broadcast %cst_159 : f32 to vector<1x1xf32>
    %469 = vector.extract_strided_slice %458 {offsets = [0, 1], sizes = [1, 31], strides = [1, 1]} : vector<1x32xf32> to vector<1x31xf32>
    %470 = tpu.concatenate %469, %468 in 1 : vector<1x31xf32>, vector<1x1xf32> -> vector<1x32xf32>
    %cst_160 = arith.constant 0.000000e+00 : f32
    %471 = vector.broadcast %cst_160 : f32 to vector<1x32xf32>
    %472 = arith.select %467, %470, %471 : vector<1x32xi1>, vector<1x32xf32>
    %473 = arith.addf %465, %457 : vector<1x32xf32>
    %474 = arith.addf %473, %472 : vector<1x32xf32>
    %c0_161 = arith.constant 0 : index
    %c13 = arith.constant 13 : index
    %475 = vector.load %arg5[%c0_161, %c13] : memref<16x16xf32, #tpu.memory_space<vmem>>, vector<1x1xf32>
    %476 = vector.broadcast %475 : vector<1x1xf32> to vector<1x32xf32>
    %477 = arith.addf %474, %476 : vector<1x32xf32>
    %c0_162 = arith.constant 0 : index
    %c14 = arith.constant 14 : index
    %478 = vector.load %arg5[%c0_162, %c14] : memref<16x16xf32, #tpu.memory_space<vmem>>, vector<1x1xf32>
    %c0_163 = arith.constant 0 : index
    %c15 = arith.constant 15 : index
    %479 = vector.load %arg5[%c0_163, %c15] : memref<16x16xf32, #tpu.memory_space<vmem>>, vector<1x1xf32>
    %480 = vector.broadcast %478 : vector<1x1xf32> to vector<1x32xf32>
    %481 = arith.mulf %477, %480 : vector<1x32xf32>
    %482 = vector.broadcast %479 : vector<1x1xf32> to vector<1x32xf32>
    %483 = arith.addf %481, %482 : vector<1x32xf32>
    %c0_164 = arith.constant 0 : index
    %c0_165 = arith.constant 0 : index
    %484 = vector.load %arg6[%c0_164, %c0_165] : memref<1x32xf32, #tpu.memory_space<vmem>>, vector<1x32xf32>
    tpu.vector_store %arg6[%c0_164, %c0_165], %483 {strides = array<i32>} : memref<1x32xf32, #tpu.memory_space<vmem>>, vector<1x32xf32>,
    return
  }
}

</mosaic_0001>

<llo_original>
// kernel: unet1d_forward.1
$region0: #{unet1d_forward.1}
  #allocation0 [shape = 'u32[]', space=smem, size = 0x4, offset = 0x4, fixed_abs, tag = 'smem constant byte address 0x4 - core index']
  #allocation1 [shape = 'u32[72,128]{1,0:T(1,128)}', space=vmem, size = 0x9000, scoped, tag = 'internal scratch']
  %s0 = inlined_call_operand.vmem [shape: f32[1,32], index: 0, kind: input, shape index: {}]
  %s1 = inlined_call_operand.vmem [shape: f32[2,2,128], index: 1, kind: input, shape index: {}]
  %s2 = inlined_call_operand.vmem [shape: bf16[2,128,128], index: 2, kind: input, shape index: {}]
  %s3 = inlined_call_operand.vmem [shape: f32[2,128], index: 3, kind: input, shape index: {}]
  %s4 = inlined_call_operand.vmem [shape: bf16[496,16], index: 4, kind: input, shape index: {}]
  %s5 = inlined_call_operand.vmem [shape: f32[16,16], index: 5, kind: input, shape index: {}]
  %s6 = inlined_call_operand.vmem [shape: f32[1,32], index: 6, kind: output, shape index: {0}]
  %s7 = inlined_call_operand.hbm [shape: f32[2,128], index: 7, kind: output, shape index: {1}]
  %8 = xla_tuple %s6, %s7
  %s9 = sld [smem:[#allocation0]]
  $region42: #{unet1d_forward.1} parent=0
    _
  %s11 = ssub.s32 1, %s9
  %s12 = scalar_select 0, %s11, %s9
  $region1: #{unet1d_forward.1} parent=0
    #allocation2 [shape = 'u8[1024]{0}', space=vmem, size = 0x400, scoped, tag = 'output window, operand 1, single buffered']
    #allocation3 [shape = 's32[1]{0}', space=sflag, size = 0x4, scoped, tag = 'scoped memory for unet1d_forward.1']
    %13 = vsyncpa [#allocation3], 0
    // Predicated region
    $region2: #{unet1d_forward.1} parent=1 // pred_check
      _
    $region3: #{unet1d_forward.1} parent=1 // pred_check_branch
      %15 = sbr.rel (0) target = $region5
    $region4: #{unet1d_forward.1} parent=1 // pred_region
      _
    $region5: #{unet1d_forward.1} parent=1 // pred_fallthru
      _
    // Predicated region
    $region6: #{unet1d_forward.1} parent=1 // pred_check
      _
    $region7: #{unet1d_forward.1} parent=1 // pred_check_branch
      %17 = sbr.rel (0) target = $region9
    $region8: #{unet1d_forward.1} parent=1 // pred_region
      _
    $region9: #{unet1d_forward.1} parent=1 // pred_fallthru
      _
    // Predicated region
    $region10: #{unet1d_forward.1} parent=1 // pred_check
      _
    $region11: #{unet1d_forward.1} parent=1 // pred_check_branch
      %19 = sbr.rel (0) target = $region13
    $region12: #{unet1d_forward.1} parent=1 // pred_region
      _
    $region13: #{unet1d_forward.1} parent=1 // pred_fallthru
      _
    // Predicated region
    $region14: #{unet1d_forward.1} parent=1 // pred_check
      _
    $region15: #{unet1d_forward.1} parent=1 // pred_check_branch
      %21 = sbr.rel (0) target = $region17
    $region16: #{unet1d_forward.1} parent=1 // pred_region
      _
    $region17: #{unet1d_forward.1} parent=1 // pred_fallthru
      _
    // Predicated region
    $region18: #{unet1d_forward.1} parent=1 // pred_check
      _
    $region19: #{unet1d_forward.1} parent=1 // pred_check_branch
      %23 = sbr.rel (0) target = $region21
    $region20: #{unet1d_forward.1} parent=1 // pred_region
      _
    $region21: #{unet1d_forward.1} parent=1 // pred_fallthru
      _
    // Predicated region
    $region22: #{unet1d_forward.1} parent=1 // pred_check
      _
    $region23: #{unet1d_forward.1} parent=1 // pred_check_branch
      %25 = sbr.rel (0) target = $region25
    $region24: #{unet1d_forward.1} parent=1 // pred_region
      _
    $region25: #{unet1d_forward.1} parent=1 // pred_fallthru
      _
    %v27 = vlaneseq
    %v28 = vand.u32 %v27, 127
    %vm29 = vcmp.lt.s32.totalorder %v28, 0
    %v30 = vsub.s32 0, %v28
    %v31 = vsel %vm29, %v30, %v28
    %v32 = vshrl.u32 %v31, 4
    %v33 = vand.u32 %v31, 15
    %v34 = vsub.s32 0, %v33
    %v35 = vsel %vm29, %v34, %v33
    %vm36 = vcmp.ne.s32.totalorder %v35, 0
    %vm37 = vcmp.lt.s32.totalorder %v35, 0
    %vm38 = vmand %vm37, %vm36
    %v39 = vadd.s32 %v35, 16
    %v40 = vsel %vm38, %v39, %v35
    %v41 = vld [vmem:[%s1] sm:$0x3]
    %s42 = scalar_lea.vmem %s1, 2
    %v43 = vld [vmem:[%s42] sm:$0x3]
    %v44 = vld [vmem:[%s2] sm:$0xf]
    %v45 = vld [vmem:[%s2 + $0x4] sm:$0xf]
    %v46 = vld [vmem:[%s2 + $0x8] sm:$0xf]
    %v47 = vld [vmem:[%s2 + $0xc] sm:$0xf]
    %v48 = vld [vmem:[%s2 + $0x10] sm:$0xf]
    %v49 = vld [vmem:[%s2 + $0x14] sm:$0xf]
    %v50 = vld [vmem:[%s2 + $0x18] sm:$0xf]
    %v51 = vld [vmem:[%s2 + $0x1c] sm:$0xf]
    %v52 = vld [vmem:[%s2 + $0x20] sm:$0xf]
    %v53 = vld [vmem:[%s2 + $0x24] sm:$0xf]
    %v54 = vld [vmem:[%s2 + $0x28] sm:$0xf]
    %v55 = vld [vmem:[%s2 + $0x2c] sm:$0xf]
    %v56 = vld [vmem:[%s2 + $0x30] sm:$0xf]
    %v57 = vld [vmem:[%s2 + $0x34] sm:$0xf]
    %v58 = vld [vmem:[%s2 + $0x38] sm:$0xf]
    %v59 = vld [vmem:[%s2 + $0x3c] sm:$0xf]
    %v60 = vpack.c.bf16 %v41, %v41
    %v61 = vld [vmem:[%s3] sm:$0x1]
    %v62 = vperm.slane %v61, 0
    %v79 = vunpack.c.l.b16 %v44
    %v80 = vunpack.c.l.b16 %v45
    %v81 = vunpack.c.l.b16 %v46
    %v82 = vunpack.c.l.b16 %v47
    %v83 = vunpack.c.l.b16 %v48
    %v84 = vunpack.c.l.b16 %v49
    %v85 = vunpack.c.l.b16 %v50
    %v86 = vunpack.c.l.b16 %v51
    %v87 = vunpack.c.l.b16 %v52
    %v88 = vunpack.c.l.b16 %v53
    %v89 = vunpack.c.l.b16 %v54
    %v90 = vunpack.c.l.b16 %v55
    %v91 = vunpack.c.l.b16 %v56
    %v92 = vunpack.c.l.b16 %v57
    %v93 = vunpack.c.l.b16 %v58
    %v94 = vunpack.c.l.b16 %v59
    %v95 = vpack.c.b16 %v80, %v79
    %v96 = vpack.c.b16 %v82, %v81
    %v97 = vpack.c.b16 %v84, %v83
    %v98 = vpack.c.b16 %v86, %v85
    %v99 = vpack.c.b16 %v88, %v87
    %v100 = vpack.c.b16 %v90, %v89
    %v101 = vpack.c.b16 %v92, %v91
    %v102 = vpack.c.b16 %v94, %v93
    %111 = vmatpush.bf16.msra.mxu0 %v102
    %112 = vmatpush.bf16.msra.mxu0 %v101
    %113 = vmatpush.bf16.msra.mxu0 %v100
    %114 = vmatpush.bf16.msra.mxu0 %v99
    %115 = vmatpush.bf16.msra.mxu0 %v98
    %116 = vmatpush.bf16.msra.mxu0 %v97
    %117 = vmatpush.bf16.msra.mxu0 %v96
    %118 = vmatpush.bf16.msra.mxu0 %v95
    %119 = vmatmul.bf16.gmra.mxu0 %v60
    %v120 = vpop.f32.mrf.mxu0
    %v121 = vadd.f32 %v62, %v120
    %v122 = vpop.f32.mrf.mxu0
    %123 = vdwg.mxu0
    %v124 = vmax.f32 %v121, 0.0
    %s125 = scalar_lea.vmem %s2, 64
    %v126 = vld [vmem:[%s125] sm:$0xf]
    %v127 = vld [vmem:[%s125 + $0x4] sm:$0xf]
    %v128 = vld [vmem:[%s125 + $0x8] sm:$0xf]
    %v129 = vld [vmem:[%s125 + $0xc] sm:$0xf]
    %v130 = vld [vmem:[%s125 + $0x10] sm:$0xf]
    %v131 = vld [vmem:[%s125 + $0x14] sm:$0xf]
    %v132 = vld [vmem:[%s125 + $0x18] sm:$0xf]
    %v133 = vld [vmem:[%s125 + $0x1c] sm:$0xf]
    %v134 = vld [vmem:[%s125 + $0x20] sm:$0xf]
    %v135 = vld [vmem:[%s125 + $0x24] sm:$0xf]
    %v136 = vld [vmem:[%s125 + $0x28] sm:$0xf]
    %v137 = vld [vmem:[%s125 + $0x2c] sm:$0xf]
    %v138 = vld [vmem:[%s125 + $0x30] sm:$0xf]
    %v139 = vld [vmem:[%s125 + $0x34] sm:$0xf]
    %v140 = vld [vmem:[%s125 + $0x38] sm:$0xf]
    %v141 = vld [vmem:[%s125 + $0x3c] sm:$0xf]
    %v142 = vpack.c.bf16 %v124, %v124
    %v143 = vld [vmem:[%s3 + $0x1] sm:$0x1]
    %v144 = vperm.slane %v143, 0
    %v161 = vunpack.c.l.b16 %v126
    %v162 = vunpack.c.l.b16 %v127
    %v163 = vunpack.c.l.b16 %v128
    %v164 = vunpack.c.l.b16 %v129
    %v165 = vunpack.c.l.b16 %v130
    %v166 = vunpack.c.l.b16 %v131
    %v167 = vunpack.c.l.b16 %v132
    %v168 = vunpack.c.l.b16 %v133
    %v169 = vunpack.c.l.b16 %v134
    %v170 = vunpack.c.l.b16 %v135
    %v171 = vunpack.c.l.b16 %v136
    %v172 = vunpack.c.l.b16 %v137
    %v173 = vunpack.c.l.b16 %v138
    %v174 = vunpack.c.l.b16 %v139
    %v175 = vunpack.c.l.b16 %v140
    %v176 = vunpack.c.l.b16 %v141
    %v177 = vpack.c.b16 %v162, %v161
    %v178 = vpack.c.b16 %v164, %v163
    %v179 = vpack.c.b16 %v166, %v165
    %v180 = vpack.c.b16 %v168, %v167
    %v181 = vpack.c.b16 %v170, %v169
    %v182 = vpack.c.b16 %v172, %v171
    %v183 = vpack.c.b16 %v174, %v173
    %v184 = vpack.c.b16 %v176, %v175
    %193 = vmatpush.bf16.msra.mxu0 %v184
    %194 = vmatpush.bf16.msra.mxu0 %v183
    %195 = vmatpush.bf16.msra.mxu0 %v182
    %196 = vmatpush.bf16.msra.mxu0 %v181
    %197 = vmatpush.bf16.msra.mxu0 %v180
    %198 = vmatpush.bf16.msra.mxu0 %v179
    %199 = vmatpush.bf16.msra.mxu0 %v178
    %200 = vmatpush.bf16.msra.mxu0 %v177
    %201 = vmatmul.bf16.gmra.mxu0 %v142
    %v202 = vpop.f32.mrf.mxu0
    %v203 = vadd.f32 %v144, %v202
    %v204 = vpop.f32.mrf.mxu0
    %205 = vdwg.mxu0
    %v206 = vadd.f32 %v203, %v43
    %207 = vst [vmem:[#allocation2] sm:$0x3] %v206
    %v208 = vld [vmem:[%s0] sm:$0x1]
    %v209 = vld [vmem:[%s4] sm:$0xf]
    %v210 = vld [vmem:[%s4 + $0x4] sm:$0xf]
    %v211 = vld [vmem:[%s4 + $0x8] sm:$0xf]
    %v212 = vpack.c.bf16 %v208, %v208
    %v216 = vunpack.c.l.b16 %v209
    %v217 = vunpack.c.l.b16 %v210
    %v218 = vunpack.c.l.b16 %v211
    %v219 = vpack.c.b16 %v217, %v216
    %v220 = vpack.c.b16 %v218, %v218
    %vm221 = vcmask 7168
    %v223 = vsel %vm221, %v219, 0
    %v226 = vsel %vm221, %v220, 0
    %vm228 = vcmask 1040384
    %v229 = vsel 0, 4294967295, 65535
    %v230 = vsel %vm228, %v229, 0
    %v232 = vand.u32 %v212, %v230
    %234 = vmatpush.bf16.msra.mxu0 0
    %235 = vmatpush.bf16.msra.mxu0 0
    %236 = vmatpush.bf16.msra.mxu0 0
    %237 = vmatpush.bf16.msra.mxu0 0
    %238 = vmatpush.bf16.msra.mxu0 0
    %239 = vmatpush.bf16.msra.mxu0 0
    %240 = vmatpush.bf16.msra.mxu0 0
    %241 = vmatpush.bf16.msra.mxu0 %v232
    %242 = vmatmul.bf16.gmra.mxu0 %v223
    %v243 = vpop.f32.mrf.mxu0
    %v244 = vadd.f32 0.0, %v243
    %v245 = vpop.f32.mrf.mxu0
    %v246 = vadd.f32 0.0, %v245
    %247 = vmatmul.bf16.gmra.mxu0 %v226
    %v248 = vpop.f32.mrf.mxu0
    %v249 = vadd.f32 0.0, %v248
    %v250 = vpop.f32.mrf.mxu0
    %251 = vdwg.mxu0
    %vm252 = vcmp.ge.s32.totalorder %v40, 1
    %254 = vrot.lane.b32.xlu0 %v244, 1
    %v255 = vpop.permute.xlu0 %254
    %v257 = vsel %vm221, 0.0, %v255
    %v258 = vsel %vm252, 1, 0
    %vm259 = vcmp.eq.s32.totalorder %v258, 1
    %v260 = vsel %vm259, %v257, 0.0
    %vm261 = vcmp.lt.s32.totalorder %v40, 15
    %263 = vrot.lane.b32.xlu0 %v249, 127
    %v264 = vpop.permute.xlu0 %263
    %vm266 = vcmask 252928
    %v267 = vsel %vm266, %v264, 0.0
    %v268 = vsel %vm261, 1, 0
    %vm269 = vcmp.eq.s32.totalorder %v268, 1
    %v270 = vsel %vm269, %v267, 0.0
    %v271 = vadd.f32 %v260, %v246
    %v272 = vadd.f32 %v271, %v270
    %v273 = vld [vmem:[%s5] sm:$0xff]
    %275 = vset.pattern.permute.xlu0 0
    %276 = vperm.xlu0 %275, %v273
    %v277 = vpop.permute.xlu0 %276
    %v279 = vadd.f32 %v272, %v277
    %v280 = vmax.f32 %v279, 0.0
    %v281 = vld [vmem:[%s4 + $0xc] sm:$0xf]
    %v282 = vld [vmem:[%s4 + $0x10] sm:$0xf]
    %v283 = vld [vmem:[%s4 + $0x14] sm:$0xf]
    %v284 = vpack.c.bf16 %v280, %v280
    %v288 = vunpack.c.l.b16 %v281
    %v289 = vunpack.c.l.b16 %v282
    %v290 = vunpack.c.l.b16 %v283
    %v291 = vpack.c.b16 %v289, %v288
    %v292 = vpack.c.b16 %v290, %v290
    %vm293 = vcmask 64512
    %v295 = vsel %vm293, %v291, 0
    %v298 = vsel %vm293, %v292, 0
    %vm300 = vcmask 1043456
    %v302 = vsel %vm300, %v284, 0
    %304 = vmatpush.bf16.msra.mxu0 0
    %305 = vmatpush.bf16.msra.mxu0 0
    %306 = vmatpush.bf16.msra.mxu0 0
    %307 = vmatpush.bf16.msra.mxu0 0
    %308 = vmatpush.bf16.msra.mxu0 0
    %309 = vmatpush.bf16.msra.mxu0 0
    %310 = vmatpush.bf16.msra.mxu0 0
    %311 = vmatpush.bf16.msra.mxu0 %v302
    %312 = vmatmul.bf16.gmra.mxu0 %v295
    %v313 = vpop.f32.mrf.mxu0
    %v314 = vadd.f32 0.0, %v313
    %v315 = vpop.f32.mrf.mxu0
    %v316 = vadd.f32 0.0, %v315
    %317 = vmatmul.bf16.gmra.mxu0 %v298
    %v318 = vpop.f32.mrf.mxu0
    %v319 = vadd.f32 0.0, %v318
    %v320 = vpop.f32.mrf.mxu0
    %321 = vdwg.mxu0
    %323 = vrot.lane.b32.xlu0 %v314, 1
    %v324 = vpop.permute.xlu0 %323
    %v326 = vsel %vm221, 0.0, %v324
    %v327 = vsel %vm259, %v326, 0.0
    %329 = vrot.lane.b32.xlu0 %v319, 127
    %v330 = vpop.permute.xlu0 %329
    %v332 = vsel %vm266, %v330, 0.0
    %v333 = vsel %vm269, %v332, 0.0
    %v334 = vadd.f32 %v327, %v316
    %v335 = vadd.f32 %v334, %v333
    %336 = vset.pattern.permute.xlu0 1
    %337 = vperm.xlu0 %336, %v273
    %v338 = vpop.permute.xlu0 %337
    %v340 = vadd.f32 %v335, %v338
    %342 = vrot.lane.b32.xlu0 %v340, 127
    %v343 = vpop.permute.xlu0 %342
    %v345 = vsel %vm266, %v343, 0.0
    %v346 = vmax.f32 %v340, %v345
    %v347 = vld [vmem:[%s4 + $0x18] sm:$0xf]
    %v348 = vld [vmem:[%s4 + $0x1c] sm:$0xf]
    %v349 = vld [vmem:[%s4 + $0x20] sm:$0xf]
    %v350 = vld [vmem:[%s4 + $0x24] sm:$0xf]
    %v351 = vld [vmem:[%s4 + $0x28] sm:$0xf]
    %v352 = vld [vmem:[%s4 + $0x2c] sm:$0xf]
    %v353 = vpack.c.bf16 %v346, %v346
    %v360 = vunpack.c.l.b16 %v347
    %v361 = vunpack.c.l.b16 %v348
    %v362 = vunpack.c.l.b16 %v349
    %v363 = vunpack.c.l.b16 %v350
    %v364 = vunpack.c.l.b16 %v351
    %v365 = vunpack.c.l.b16 %v352
    %v366 = vpack.c.b16 %v361, %v360
    %v367 = vpack.c.b16 %v363, %v362
    %v368 = vpack.c.b16 %v365, %v364
    %v370 = vsel %vm293, %v366, 0
    %v373 = vsel %vm293, %v367, 0
    %v376 = vsel %vm293, %v368, 0
    %v379 = vsel %vm300, %v353, 0
    %381 = vmatpush.bf16.msra.mxu0 0
    %382 = vmatpush.bf16.msra.mxu0 0
    %383 = vmatpush.bf16.msra.mxu0 0
    %384 = vmatpush.bf16.msra.mxu0 0
    %385 = vmatpush.bf16.msra.mxu0 0
    %386 = vmatpush.bf16.msra.mxu0 0
    %387 = vmatpush.bf16.msra.mxu0 0
    %388 = vmatpush.bf16.msra.mxu0 %v379
    %389 = vmatmul.bf16.gmra.mxu0 %v370
    %v390 = vpop.f32.mrf.mxu0
    %v391 = vadd.f32 0.0, %v390
    %v392 = vpop.f32.mrf.mxu0
    %v393 = vadd.f32 0.0, %v392
    %394 = vmatmul.bf16.gmra.mxu0 %v373
    %v395 = vpop.f32.mrf.mxu0
    %v396 = vadd.f32 0.0, %v395
    %v397 = vpop.f32.mrf.mxu0
    %v398 = vadd.f32 0.0, %v397
    %399 = vmatmul.bf16.gmra.mxu0 %v376
    %v400 = vpop.f32.mrf.mxu0
    %v401 = vadd.f32 0.0, %v400
    %v402 = vpop.f32.mrf.mxu0
    %v403 = vadd.f32 0.0, %v402
    %404 = vdwg.mxu0
    %vm405 = vcmp.ge.s32.totalorder %v40, 2
    %408 = vrot.lane.b32.xlu0 %v391, 2
    %v409 = vpop.permute.xlu0 %408
    %410 = vrot.lane.b32.xlu0 %v393, 2
    %v411 = vpop.permute.xlu0 %410
    %vm414 = vcmask 15360
    %v415 = vsel %vm414, 0.0, %v409
    %v416 = vsel %vm414, 0.0, %v411
    %v417 = vsel %vm405, 1, 0
    %vm418 = vcmp.eq.s32.totalorder %v417, 1
    %v419 = vsel %vm418, %v415, 0.0
    %v420 = vsel %vm418, %v416, 0.0
    %vm421 = vcmp.lt.s32.totalorder %v40, 14
    %424 = vrot.lane.b32.xlu0 %v401, 126
    %v425 = vpop.permute.xlu0 %424
    %426 = vrot.lane.b32.xlu0 %v403, 126
    %v427 = vpop.permute.xlu0 %426
    %vm430 = vcmask 244736
    %v431 = vsel %vm430, %v425, 0.0
    %v432 = vsel %vm430, %v427, 0.0
    %v433 = vsel %vm421, 1, 0
    %vm434 = vcmp.eq.s32.totalorder %v433, 1
    %v435 = vsel %vm434, %v431, 0.0
    %v436 = vsel %vm434, %v432, 0.0
    %v437 = vadd.f32 %v419, %v396
    %v438 = vadd.f32 %v420, %v398
    %v439 = vadd.f32 %v437, %v435
    %v440 = vadd.f32 %v438, %v436
    %v441 = vld [vmem:[%s5] sm:$0xff]
    %v442 = vld [vmem:[%s5 + $0x8] sm:$0xff]
    %444 = vset.pattern.permute.xlu0 2
    %445 = vperm.xlu0 %444, %v441
    %v446 = vpop.permute.xlu0 %445
    %449 = vset.pattern.permute.xlu0 2
    %450 = vperm.xlu0 %449, %v442
    %v451 = vpop.permute.xlu0 %450
    %v453 = vadd.f32 %v439, %v446
    %v454 = vadd.f32 %v440, %v451
    %v455 = vmax.f32 %v453, 0.0
    %v456 = vmax.f32 %v454, 0.0
    %v457 = vld [vmem:[%s4 + $0x30] sm:$0xf]
    %v458 = vld [vmem:[%s4 + $0x34] sm:$0xf]
    %v459 = vld [vmem:[%s4 + $0x38] sm:$0xf]
    %v460 = vld [vmem:[%s4 + $0x3c] sm:$0xf]
    %v461 = vld [vmem:[%s4 + $0x40] sm:$0xf]
    %v462 = vld [vmem:[%s4 + $0x44] sm:$0xf]
    %v463 = vpack.c.bf16 %v456, %v455
    %v470 = vunpack.c.l.b16 %v457
    %v471 = vunpack.c.l.b16 %v458
    %v472 = vunpack.c.l.b16 %v459
    %v473 = vunpack.c.l.b16 %v460
    %v474 = vunpack.c.l.b16 %v461
    %v475 = vunpack.c.l.b16 %v462
    %v476 = vpack.c.b16 %v471, %v470
    %v477 = vpack.c.b16 %v473, %v472
    %v478 = vpack.c.b16 %v475, %v474
    %vm479 = vcmask 130048
    %v481 = vsel %vm479, %v476, 0
    %v484 = vsel %vm479, %v477, 0
    %v487 = vsel %vm479, %v478, 0
    %489 = vmatpush.bf16.msra.mxu0 0
    %490 = vmatpush.bf16.msra.mxu0 0
    %491 = vmatpush.bf16.msra.mxu0 0
    %492 = vmatpush.bf16.msra.mxu0 0
    %493 = vmatpush.bf16.msra.mxu0 0
    %494 = vmatpush.bf16.msra.mxu0 0
    %495 = vmatpush.bf16.msra.mxu0 0
    %496 = vmatpush.bf16.msra.mxu0 %v463
    %497 = vmatmul.bf16.gmra.mxu0 %v481
    %v498 = vpop.f32.mrf.mxu0
    %v499 = vadd.f32 0.0, %v498
    %v500 = vpop.f32.mrf.mxu0
    %v501 = vadd.f32 0.0, %v500
    %502 = vmatmul.bf16.gmra.mxu0 %v484
    %v503 = vpop.f32.mrf.mxu0
    %v504 = vadd.f32 0.0, %v503
    %v505 = vpop.f32.mrf.mxu0
    %v506 = vadd.f32 0.0, %v505
    %507 = vmatmul.bf16.gmra.mxu0 %v487
    %v508 = vpop.f32.mrf.mxu0
    %v509 = vadd.f32 0.0, %v508
    %v510 = vpop.f32.mrf.mxu0
    %v511 = vadd.f32 0.0, %v510
    %512 = vdwg.mxu0
    %515 = vrot.lane.b32.xlu0 %v499, 2
    %v516 = vpop.permute.xlu0 %515
    %517 = vrot.lane.b32.xlu0 %v501, 2
    %v518 = vpop.permute.xlu0 %517
    %v521 = vsel %vm414, 0.0, %v516
    %v522 = vsel %vm414, 0.0, %v518
    %v523 = vsel %vm418, %v521, 0.0
    %v524 = vsel %vm418, %v522, 0.0
    %527 = vrot.lane.b32.xlu0 %v509, 126
    %v528 = vpop.permute.xlu0 %527
    %529 = vrot.lane.b32.xlu0 %v511, 126
    %v530 = vpop.permute.xlu0 %529
    %v533 = vsel %vm430, %v528, 0.0
    %v534 = vsel %vm430, %v530, 0.0
    %v535 = vsel %vm434, %v533, 0.0
    %v536 = vsel %vm434, %v534, 0.0
    %v537 = vadd.f32 %v523, %v504
    %v538 = vadd.f32 %v524, %v506
    %v539 = vadd.f32 %v537, %v535
    %v540 = vadd.f32 %v538, %v536
    %541 = vset.pattern.permute.xlu0 3
    %542 = vperm.xlu0 %541, %v441
    %v543 = vpop.permute.xlu0 %542
    %545 = vset.pattern.permute.xlu0 3
    %546 = vperm.xlu0 %545, %v442
    %v547 = vpop.permute.xlu0 %546
    %v549 = vadd.f32 %v539, %v543
    %v550 = vadd.f32 %v540, %v547
    %553 = vrot.lane.b32.xlu0 %v549, 126
    %v554 = vpop.permute.xlu0 %553
    %555 = vrot.lane.b32.xlu0 %v550, 126
    %v556 = vpop.permute.xlu0 %555
    %v559 = vsel %vm430, %v554, 0.0
    %v560 = vsel %vm430, %v556, 0.0
    %v561 = vmax.f32 %v549, %v559
    %v562 = vmax.f32 %v550, %v560
    %v563 = vld [vmem:[%s4 + $0x48] sm:$0xf]
    %v564 = vld [vmem:[%s4 + $0x4c] sm:$0xf]
    %v565 = vld [vmem:[%s4 + $0x50] sm:$0xf]
    %v566 = vld [vmem:[%s4 + $0x54] sm:$0xf]
    %v567 = vld [vmem:[%s4 + $0x58] sm:$0xf]
    %v568 = vld [vmem:[%s4 + $0x5c] sm:$0xf]
    %v569 = vpack.c.bf16 %v562, %v561
    %v576 = vunpack.c.l.b16 %v563
    %v577 = vunpack.c.l.b16 %v564
    %v578 = vunpack.c.l.b16 %v565
    %v579 = vunpack.c.l.b16 %v566
    %v580 = vunpack.c.l.b16 %v567
    %v581 = vunpack.c.l.b16 %v568
    %v582 = vpack.c.b16 %v577, %v576
    %v583 = vpack.c.b16 %v579, %v578
    %v584 = vpack.c.b16 %v581, %v580
    %v586 = vsel %vm479, %v582, 0
    %v589 = vsel %vm479, %v583, 0
    %v592 = vsel %vm479, %v584, 0
    %594 = vmatpush.bf16.msra.mxu0 0
    %595 = vmatpush.bf16.msra.mxu0 0
    %596 = vmatpush.bf16.msra.mxu0 0
    %597 = vmatpush.bf16.msra.mxu0 0
    %598 = vmatpush.bf16.msra.mxu0 0
    %599 = vmatpush.bf16.msra.mxu0 0
    %600 = vmatpush.bf16.msra.mxu0 0
    %601 = vmatpush.bf16.msra.mxu0 %v569
    %602 = vmatmul.bf16.gmra.mxu0 %v586
    %v603 = vpop.f32.mrf.mxu0
    %v604 = vadd.f32 0.0, %v603
    %v605 = vpop.f32.mrf.mxu0
    %v606 = vadd.f32 0.0, %v605
    %607 = vmatmul.bf16.gmra.mxu0 %v589
    %v608 = vpop.f32.mrf.mxu0
    %v609 = vadd.f32 0.0, %v608
    %v610 = vpop.f32.mrf.mxu0
    %v611 = vadd.f32 0.0, %v610
    %612 = vmatmul.bf16.gmra.mxu0 %v592
    %v613 = vpop.f32.mrf.mxu0
    %v614 = vadd.f32 0.0, %v613
    %v615 = vpop.f32.mrf.mxu0
    %v616 = vadd.f32 0.0, %v615
    %617 = vdwg.mxu0
    %vm618 = vcmp.ge.s32.totalorder %v40, 4
    %621 = vrot.lane.b32.xlu0 %v604, 4
    %v622 = vpop.permute.xlu0 %621
    %623 = vrot.lane.b32.xlu0 %v606, 4
    %v624 = vpop.permute.xlu0 %623
    %vm627 = vcmask 31744
    %v628 = vsel %vm627, 0.0, %v622
    %v629 = vsel %vm627, 0.0, %v624
    %v630 = vsel %vm618, 1, 0
    %vm631 = vcmp.eq.s32.totalorder %v630, 1
    %v632 = vsel %vm631, %v628, 0.0
    %v633 = vsel %vm631, %v629, 0.0
    %vm634 = vcmp.lt.s32.totalorder %v40, 12
    %637 = vrot.lane.b32.xlu0 %v614, 124
    %v638 = vpop.permute.xlu0 %637
    %639 = vrot.lane.b32.xlu0 %v616, 124
    %v640 = vpop.permute.xlu0 %639
    %vm643 = vcmask 228352
    %v644 = vsel %vm643, %v638, 0.0
    %v645 = vsel %vm643, %v640, 0.0
    %v646 = vsel %vm634, 1, 0
    %vm647 = vcmp.eq.s32.totalorder %v646, 1
    %v648 = vsel %vm647, %v644, 0.0
    %v649 = vsel %vm647, %v645, 0.0
    %v650 = vadd.f32 %v632, %v609
    %v651 = vadd.f32 %v633, %v611
    %v652 = vadd.f32 %v650, %v648
    %v653 = vadd.f32 %v651, %v649
    %654 = vset.pattern.permute.xlu0 4
    %655 = vperm.xlu0 %654, %v441
    %v656 = vpop.permute.xlu0 %655
    %658 = vset.pattern.permute.xlu0 4
    %659 = vperm.xlu0 %658, %v442
    %v660 = vpop.permute.xlu0 %659
    %v662 = vadd.f32 %v652, %v656
    %v663 = vadd.f32 %v653, %v660
    %v664 = vmax.f32 %v662, 0.0
    %v665 = vmax.f32 %v663, 0.0
    %v666 = vld [vmem:[%s4 + $0x60] sm:$0xf]
    %v667 = vld [vmem:[%s4 + $0x64] sm:$0xf]
    %v668 = vld [vmem:[%s4 + $0x68] sm:$0xf]
    %v669 = vld [vmem:[%s4 + $0x6c] sm:$0xf]
    %v670 = vld [vmem:[%s4 + $0x70] sm:$0xf]
    %v671 = vld [vmem:[%s4 + $0x74] sm:$0xf]
    %v672 = vpack.c.bf16 %v665, %v664
    %v679 = vunpack.c.l.b16 %v666
    %v680 = vunpack.c.l.b16 %v667
    %v681 = vunpack.c.l.b16 %v668
    %v682 = vunpack.c.l.b16 %v669
    %v683 = vunpack.c.l.b16 %v670
    %v684 = vunpack.c.l.b16 %v671
    %v685 = vpack.c.b16 %v680, %v679
    %v686 = vpack.c.b16 %v682, %v681
    %v687 = vpack.c.b16 %v684, %v683
    %v689 = vsel %vm479, %v685, 0
    %v692 = vsel %vm479, %v686, 0
    %v695 = vsel %vm479, %v687, 0
    %697 = vmatpush.bf16.msra.mxu0 0
    %698 = vmatpush.bf16.msra.mxu0 0
    %699 = vmatpush.bf16.msra.mxu0 0
    %700 = vmatpush.bf16.msra.mxu0 0
    %701 = vmatpush.bf16.msra.mxu0 0
    %702 = vmatpush.bf16.msra.mxu0 0
    %703 = vmatpush.bf16.msra.mxu0 0
    %704 = vmatpush.bf16.msra.mxu0 %v672
    %705 = vmatmul.bf16.gmra.mxu0 %v689
    %v706 = vpop.f32.mrf.mxu0
    %v707 = vadd.f32 0.0, %v706
    %v708 = vpop.f32.mrf.mxu0
    %v709 = vadd.f32 0.0, %v708
    %710 = vmatmul.bf16.gmra.mxu0 %v692
    %v711 = vpop.f32.mrf.mxu0
    %v712 = vadd.f32 0.0, %v711
    %v713 = vpop.f32.mrf.mxu0
    %v714 = vadd.f32 0.0, %v713
    %715 = vmatmul.bf16.gmra.mxu0 %v695
    %v716 = vpop.f32.mrf.mxu0
    %v717 = vadd.f32 0.0, %v716
    %v718 = vpop.f32.mrf.mxu0
    %v719 = vadd.f32 0.0, %v718
    %720 = vdwg.mxu0
    %723 = vrot.lane.b32.xlu0 %v707, 4
    %v724 = vpop.permute.xlu0 %723
    %725 = vrot.lane.b32.xlu0 %v709, 4
    %v726 = vpop.permute.xlu0 %725
    %v729 = vsel %vm627, 0.0, %v724
    %v730 = vsel %vm627, 0.0, %v726
    %v731 = vsel %vm631, %v729, 0.0
    %v732 = vsel %vm631, %v730, 0.0
    %735 = vrot.lane.b32.xlu0 %v717, 124
    %v736 = vpop.permute.xlu0 %735
    %737 = vrot.lane.b32.xlu0 %v719, 124
    %v738 = vpop.permute.xlu0 %737
    %v741 = vsel %vm643, %v736, 0.0
    %v742 = vsel %vm643, %v738, 0.0
    %v743 = vsel %vm647, %v741, 0.0
    %v744 = vsel %vm647, %v742, 0.0
    %v745 = vadd.f32 %v731, %v712
    %v746 = vadd.f32 %v732, %v714
    %v747 = vadd.f32 %v745, %v743
    %v748 = vadd.f32 %v746, %v744
    %749 = vset.pattern.permute.xlu0 5
    %750 = vperm.xlu0 %749, %v441
    %v751 = vpop.permute.xlu0 %750
    %753 = vset.pattern.permute.xlu0 5
    %754 = vperm.xlu0 %753, %v442
    %v755 = vpop.permute.xlu0 %754
    %v757 = vadd.f32 %v747, %v751
    %v758 = vadd.f32 %v748, %v755
    %761 = vrot.lane.b32.xlu0 %v757, 124
    %v762 = vpop.permute.xlu0 %761
    %763 = vrot.lane.b32.xlu0 %v758, 124
    %v764 = vpop.permute.xlu0 %763
    %v767 = vsel %vm643, %v762, 0.0
    %v768 = vsel %vm643, %v764, 0.0
    %v769 = vmax.f32 %v757, %v767
    %v770 = vmax.f32 %v758, %v768
    %v771 = vld [vmem:[%s4 + $0x78] sm:$0xf]
    %v772 = vld [vmem:[%s4 + $0x7c] sm:$0xf]
    %v773 = vld [vmem:[%s4 + $0x80] sm:$0xf]
    %v774 = vld [vmem:[%s4 + $0x84] sm:$0xf]
    %v775 = vld [vmem:[%s4 + $0x88] sm:$0xf]
    %v776 = vld [vmem:[%s4 + $0x8c] sm:$0xf]
    %v777 = vpack.c.bf16 %v770, %v769
    %v784 = vunpack.c.l.b16 %v771
    %v785 = vunpack.c.l.b16 %v772
    %v786 = vunpack.c.l.b16 %v773
    %v787 = vunpack.c.l.b16 %v774
    %v788 = vunpack.c.l.b16 %v775
    %v789 = vunpack.c.l.b16 %v776
    %v790 = vpack.c.b16 %v785, %v784
    %v791 = vpack.c.b16 %v787, %v786
    %v792 = vpack.c.b16 %v789, %v788
    %v794 = vsel %vm479, %v790, 0
    %v797 = vsel %vm479, %v791, 0
    %v800 = vsel %vm479, %v792, 0
    %802 = vmatpush.bf16.msra.mxu0 0
    %803 = vmatpush.bf16.msra.mxu0 0
    %804 = vmatpush.bf16.msra.mxu0 0
    %805 = vmatpush.bf16.msra.mxu0 0
    %806 = vmatpush.bf16.msra.mxu0 0
    %807 = vmatpush.bf16.msra.mxu0 0
    %808 = vmatpush.bf16.msra.mxu0 0
    %809 = vmatpush.bf16.msra.mxu0 %v777
    %810 = vmatmul.bf16.gmra.mxu0 %v794
    %v811 = vpop.f32.mrf.mxu0
    %v812 = vadd.f32 0.0, %v811
    %v813 = vpop.f32.mrf.mxu0
    %v814 = vadd.f32 0.0, %v813
    %815 = vmatmul.bf16.gmra.mxu0 %v797
    %v816 = vpop.f32.mrf.mxu0
    %v817 = vadd.f32 0.0, %v816
    %v818 = vpop.f32.mrf.mxu0
    %v819 = vadd.f32 0.0, %v818
    %820 = vmatmul.bf16.gmra.mxu0 %v800
    %v821 = vpop.f32.mrf.mxu0
    %v822 = vadd.f32 0.0, %v821
    %v823 = vpop.f32.mrf.mxu0
    %v824 = vadd.f32 0.0, %v823
    %825 = vdwg.mxu0
    %vm826 = vcmp.ge.s32.totalorder %v40, 8
    %829 = vrot.lane.b32.xlu0 %v812, 8
    %v830 = vpop.permute.xlu0 %829
    %831 = vrot.lane.b32.xlu0 %v814, 8
    %v832 = vpop.permute.xlu0 %831
    %v835 = vsel %vm293, 0.0, %v830
    %v836 = vsel %vm293, 0.0, %v832
    %v837 = vsel %vm826, 1, 0
    %vm838 = vcmp.eq.s32.totalorder %v837, 1
    %v839 = vsel %vm838, %v835, 0.0
    %v840 = vsel %vm838, %v836, 0.0
    %vm841 = vcmp.lt.s32.totalorder %v40, 8
    %844 = vrot.lane.b32.xlu0 %v822, 120
    %v845 = vpop.permute.xlu0 %844
    %846 = vrot.lane.b32.xlu0 %v824, 120
    %v847 = vpop.permute.xlu0 %846
    %vm850 = vcmask 195584
    %v851 = vsel %vm850, %v845, 0.0
    %v852 = vsel %vm850, %v847, 0.0
    %v853 = vsel %vm841, 1, 0
    %vm854 = vcmp.eq.s32.totalorder %v853, 1
    %v855 = vsel %vm854, %v851, 0.0
    %v856 = vsel %vm854, %v852, 0.0
    %v857 = vadd.f32 %v839, %v817
    %v858 = vadd.f32 %v840, %v819
    %v859 = vadd.f32 %v857, %v855
    %v860 = vadd.f32 %v858, %v856
    %861 = vset.pattern.permute.xlu0 6
    %862 = vperm.xlu0 %861, %v441
    %v863 = vpop.permute.xlu0 %862
    %865 = vset.pattern.permute.xlu0 6
    %866 = vperm.xlu0 %865, %v442
    %v867 = vpop.permute.xlu0 %866
    %v869 = vadd.f32 %v859, %v863
    %v870 = vadd.f32 %v860, %v867
    %v871 = vmax.f32 %v869, 0.0
    %v872 = vmax.f32 %v870, 0.0
    %v873 = vld [vmem:[%s4 + $0x90] sm:$0xf]
    %v874 = vld [vmem:[%s4 + $0x94] sm:$0xf]
    %v875 = vld [vmem:[%s4 + $0x98] sm:$0xf]
    %v876 = vld [vmem:[%s4 + $0x9c] sm:$0xf]
    %v877 = vld [vmem:[%s4 + $0xa0] sm:$0xf]
    %v878 = vld [vmem:[%s4 + $0xa4] sm:$0xf]
    %v879 = vpack.c.bf16 %v872, %v871
    %v886 = vunpack.c.l.b16 %v873
    %v887 = vunpack.c.l.b16 %v874
    %v888 = vunpack.c.l.b16 %v875
    %v889 = vunpack.c.l.b16 %v876
    %v890 = vunpack.c.l.b16 %v877
    %v891 = vunpack.c.l.b16 %v878
    %v892 = vpack.c.b16 %v887, %v886
    %v893 = vpack.c.b16 %v889, %v888
    %v894 = vpack.c.b16 %v891, %v890
    %v896 = vsel %vm479, %v892, 0
    %v899 = vsel %vm479, %v893, 0
    %v902 = vsel %vm479, %v894, 0
    %904 = vmatpush.bf16.msra.mxu0 0
    %905 = vmatpush.bf16.msra.mxu0 0
    %906 = vmatpush.bf16.msra.mxu0 0
    %907 = vmatpush.bf16.msra.mxu0 0
    %908 = vmatpush.bf16.msra.mxu0 0
    %909 = vmatpush.bf16.msra.mxu0 0
    %910 = vmatpush.bf16.msra.mxu0 0
    %911 = vmatpush.bf16.msra.mxu0 %v879
    %912 = vmatmul.bf16.gmra.mxu0 %v896
    %v913 = vpop.f32.mrf.mxu0
    %v914 = vadd.f32 0.0, %v913
    %v915 = vpop.f32.mrf.mxu0
    %v916 = vadd.f32 0.0, %v915
    %917 = vmatmul.bf16.gmra.mxu0 %v899
    %v918 = vpop.f32.mrf.mxu0
    %v919 = vadd.f32 0.0, %v918
    %v920 = vpop.f32.mrf.mxu0
    %v921 = vadd.f32 0.0, %v920
    %922 = vmatmul.bf16.gmra.mxu0 %v902
    %v923 = vpop.f32.mrf.mxu0
    %v924 = vadd.f32 0.0, %v923
    %v925 = vpop.f32.mrf.mxu0
    %v926 = vadd.f32 0.0, %v925
    %927 = vdwg.mxu0
    %930 = vrot.lane.b32.xlu0 %v914, 8
    %v931 = vpop.permute.xlu0 %930
    %932 = vrot.lane.b32.xlu0 %v916, 8
    %v933 = vpop.permute.xlu0 %932
    %v936 = vsel %vm293, 0.0, %v931
    %v937 = vsel %vm293, 0.0, %v933
    %v938 = vsel %vm838, %v936, 0.0
    %v939 = vsel %vm838, %v937, 0.0
    %942 = vrot.lane.b32.xlu0 %v924, 120
    %v943 = vpop.permute.xlu0 %942
    %944 = vrot.lane.b32.xlu0 %v926, 120
    %v945 = vpop.permute.xlu0 %944
    %v948 = vsel %vm850, %v943, 0.0
    %v949 = vsel %vm850, %v945, 0.0
    %v950 = vsel %vm854, %v948, 0.0
    %v951 = vsel %vm854, %v949, 0.0
    %v952 = vadd.f32 %v938, %v919
    %v953 = vadd.f32 %v939, %v921
    %v954 = vadd.f32 %v952, %v950
    %v955 = vadd.f32 %v953, %v951
    %956 = vset.pattern.permute.xlu0 7
    %957 = vperm.xlu0 %956, %v441
    %v958 = vpop.permute.xlu0 %957
    %960 = vset.pattern.permute.xlu0 7
    %961 = vperm.xlu0 %960, %v442
    %v962 = vpop.permute.xlu0 %961
    %v964 = vadd.f32 %v954, %v958
    %v965 = vadd.f32 %v955, %v962
    %v966 = vadd.f32 %v964, %v769
    %v967 = vadd.f32 %v965, %v770
    %v968 = vld [vmem:[%s4 + $0xa8] sm:$0xf]
    %v969 = vld [vmem:[%s4 + $0xac] sm:$0xf]
    %v970 = vld [vmem:[%s4 + $0xb0] sm:$0xf]
    %v971 = vld [vmem:[%s4 + $0xb4] sm:$0xf]
    %v972 = vpack.c.bf16 %v967, %v966
    %v977 = vunpack.c.l.b16 %v968
    %v978 = vunpack.c.l.b16 %v969
    %v979 = vunpack.c.l.b16 %v970
    %v980 = vunpack.c.l.b16 %v971
    %v981 = vpack.c.b16 %v978, %v977
    %v982 = vpack.c.b16 %v980, %v979
    %v984 = vsel %vm479, %v981, 0
    %v987 = vsel %vm479, %v982, 0
    %989 = vmatpush.bf16.msra.mxu0 0
    %990 = vmatpush.bf16.msra.mxu0 0
    %991 = vmatpush.bf16.msra.mxu0 0
    %992 = vmatpush.bf16.msra.mxu0 0
    %993 = vmatpush.bf16.msra.mxu0 0
    %994 = vmatpush.bf16.msra.mxu0 0
    %995 = vmatpush.bf16.msra.mxu0 0
    %996 = vmatpush.bf16.msra.mxu0 %v972
    %997 = vmatmul.bf16.gmra.mxu0 %v984
    %v998 = vpop.f32.mrf.mxu0
    %v999 = vadd.f32 0.0, %v998
    %v1000 = vpop.f32.mrf.mxu0
    %v1001 = vadd.f32 0.0, %v1000
    %1002 = vmatmul.bf16.gmra.mxu0 %v987
    %v1003 = vpop.f32.mrf.mxu0
    %v1004 = vadd.f32 0.0, %v1003
    %v1005 = vpop.f32.mrf.mxu0
    %v1006 = vadd.f32 0.0, %v1005
    %1007 = vdwg.mxu0
    %vm1008 = vcmp.lt.s32.totalorder %v28, 0
    %v1009 = vsub.s32 0, %v28
    %v1010 = vsel %vm1008, %v1009, %v28
    %v1011 = vshrl.u32 %v1010, 3
    %v1012 = vand.u32 %v1010, 7
    %v1013 = vsub.s32 0, %v1012
    %v1014 = vsel %vm1008, %v1013, %v1012
    %vm1015 = vcmp.ne.s32.totalorder %v1014, 0
    %vm1016 = vcmp.lt.s32.totalorder %v1014, 0
    %vm1017 = vmand %vm1016, %vm1015
    %v1018 = vadd.s32 %v1014, 8
    %v1019 = vsel %vm1017, %v1018, %v1014
    %vm1020 = vcmp.eq.s32.totalorder %v1019, 0
    %1023 = vrot.lane.b32.xlu0 %v1004, 4
    %v1024 = vpop.permute.xlu0 %1023
    %1025 = vrot.lane.b32.xlu0 %v1006, 4
    %v1026 = vpop.permute.xlu0 %1025
    %v1029 = vsel %vm627, 0.0, %v1024
    %v1030 = vsel %vm627, 0.0, %v1026
    %v1031 = vsel %vm1020, 1, 0
    %vm1032 = vcmp.eq.s32.totalorder %v1031, 1
    %v1033 = vsel %vm1032, %v999, %v1029
    %v1034 = vsel %vm1032, %v1001, %v1030
    %1035 = vset.pattern.permute.xlu0 8
    %1036 = vperm.xlu0 %1035, %v441
    %v1037 = vpop.permute.xlu0 %1036
    %1039 = vset.pattern.permute.xlu0 8
    %1040 = vperm.xlu0 %1039, %v442
    %v1041 = vpop.permute.xlu0 %1040
    %v1043 = vadd.f32 %v1033, %v1037
    %v1044 = vadd.f32 %v1034, %v1041
    %v1045 = vmax.f32 %v1043, 0.0
    %v1046 = vmax.f32 %v1044, 0.0
    %v1047 = vld [vmem:[%s4 + $0xb8] sm:$0xf]
    %v1048 = vld [vmem:[%s4 + $0xbc] sm:$0xf]
    %v1049 = vld [vmem:[%s4 + $0xc0] sm:$0xf]
    %v1050 = vld [vmem:[%s4 + $0xc4] sm:$0xf]
    %v1051 = vld [vmem:[%s4 + $0xc8] sm:$0xf]
    %v1052 = vld [vmem:[%s4 + $0xcc] sm:$0xf]
    %v1053 = vpack.c.bf16 %v1046, %v1045
    %v1060 = vunpack.c.l.b16 %v1047
    %v1061 = vunpack.c.l.b16 %v1048
    %v1062 = vunpack.c.l.b16 %v1049
    %v1063 = vunpack.c.l.b16 %v1050
    %v1064 = vunpack.c.l.b16 %v1051
    %v1065 = vunpack.c.l.b16 %v1052
    %v1066 = vpack.c.b16 %v1061, %v1060
    %v1067 = vpack.c.b16 %v1063, %v1062
    %v1068 = vpack.c.b16 %v1065, %v1064
    %v1070 = vsel %vm479, %v1066, 0
    %v1073 = vsel %vm479, %v1067, 0
    %v1076 = vsel %vm479, %v1068, 0
    %1078 = vmatpush.bf16.msra.mxu0 0
    %1079 = vmatpush.bf16.msra.mxu0 0
    %1080 = vmatpush.bf16.msra.mxu0 0
    %1081 = vmatpush.bf16.msra.mxu0 0
    %1082 = vmatpush.bf16.msra.mxu0 0
    %1083 = vmatpush.bf16.msra.mxu0 0
    %1084 = vmatpush.bf16.msra.mxu0 0
    %1085 = vmatpush.bf16.msra.mxu0 %v1053
    %1086 = vmatmul.bf16.gmra.mxu0 %v1070
    %v1087 = vpop.f32.mrf.mxu0
    %v1088 = vadd.f32 0.0, %v1087
    %v1089 = vpop.f32.mrf.mxu0
    %v1090 = vadd.f32 0.0, %v1089
    %1091 = vmatmul.bf16.gmra.mxu0 %v1073
    %v1092 = vpop.f32.mrf.mxu0
    %v1093 = vadd.f32 0.0, %v1092
    %v1094 = vpop.f32.mrf.mxu0
    %v1095 = vadd.f32 0.0, %v1094
    %1096 = vmatmul.bf16.gmra.mxu0 %v1076
    %v1097 = vpop.f32.mrf.mxu0
    %v1098 = vadd.f32 0.0, %v1097
    %v1099 = vpop.f32.mrf.mxu0
    %v1100 = vadd.f32 0.0, %v1099
    %1101 = vdwg.mxu0
    %1104 = vrot.lane.b32.xlu0 %v1088, 4
    %v1105 = vpop.permute.xlu0 %1104
    %1106 = vrot.lane.b32.xlu0 %v1090, 4
    %v1107 = vpop.permute.xlu0 %1106
    %v1110 = vsel %vm627, 0.0, %v1105
    %v1111 = vsel %vm627, 0.0, %v1107
    %v1112 = vsel %vm631, %v1110, 0.0
    %v1113 = vsel %vm631, %v1111, 0.0
    %1116 = vrot.lane.b32.xlu0 %v1098, 124
    %v1117 = vpop.permute.xlu0 %1116
    %1118 = vrot.lane.b32.xlu0 %v1100, 124
    %v1119 = vpop.permute.xlu0 %1118
    %v1122 = vsel %vm643, %v1117, 0.0
    %v1123 = vsel %vm643, %v1119, 0.0
    %v1124 = vsel %vm647, %v1122, 0.0
    %v1125 = vsel %vm647, %v1123, 0.0
    %v1126 = vadd.f32 %v1112, %v1093
    %v1127 = vadd.f32 %v1113, %v1095
    %v1128 = vadd.f32 %v1126, %v1124
    %v1129 = vadd.f32 %v1127, %v1125
    %1130 = vset.pattern.permute.xlu0 9
    %1131 = vperm.xlu0 %1130, %v441
    %v1132 = vpop.permute.xlu0 %1131
    %1134 = vset.pattern.permute.xlu0 9
    %1135 = vperm.xlu0 %1134, %v442
    %v1136 = vpop.permute.xlu0 %1135
    %v1138 = vadd.f32 %v1128, %v1132
    %v1139 = vadd.f32 %v1129, %v1136
    %v1140 = vadd.f32 %v1138, %v561
    %v1141 = vadd.f32 %v1139, %v562
    %v1142 = vld [vmem:[%s4 + $0xd0] sm:$0xf]
    %v1143 = vld [vmem:[%s4 + $0xd4] sm:$0xf]
    %v1144 = vpack.c.bf16 %v1141, %v1140
    %v1147 = vunpack.c.l.b16 %v1142
    %v1148 = vunpack.c.l.b16 %v1143
    %v1149 = vpack.c.b16 %v1148, %v1147
    %v1151 = vsel %vm479, %v1149, 0
    %1153 = vmatpush.bf16.msra.mxu0 0
    %1154 = vmatpush.bf16.msra.mxu0 0
    %1155 = vmatpush.bf16.msra.mxu0 0
    %1156 = vmatpush.bf16.msra.mxu0 0
    %1157 = vmatpush.bf16.msra.mxu0 0
    %1158 = vmatpush.bf16.msra.mxu0 0
    %1159 = vmatpush.bf16.msra.mxu0 0
    %1160 = vmatpush.bf16.msra.mxu0 %v1144
    %1161 = vmatmul.bf16.gmra.mxu0 %v1151
    %v1162 = vpop.f32.mrf.mxu0
    %v1163 = vadd.f32 0.0, %v1162
    %v1164 = vpop.f32.mrf.mxu0
    %v1165 = vadd.f32 0.0, %v1164
    %1166 = vdwg.mxu0
    %vm1167 = vcmp.lt.s32.totalorder %v28, 0
    %v1168 = vsub.s32 0, %v28
    %v1169 = vsel %vm1167, %v1168, %v28
    %v1170 = vshrl.u32 %v1169, 2
    %v1171 = vand.u32 %v1169, 3
    %v1172 = vsub.s32 0, %v1171
    %v1173 = vsel %vm1167, %v1172, %v1171
    %vm1174 = vcmp.ne.s32.totalorder %v1173, 0
    %vm1175 = vcmp.lt.s32.totalorder %v1173, 0
    %vm1176 = vmand %vm1175, %vm1174
    %v1177 = vadd.s32 %v1173, 4
    %v1178 = vsel %vm1176, %v1177, %v1173
    %vm1179 = vcmp.eq.s32.totalorder %v1178, 0
    %1181 = vrot.lane.b32.xlu0 %v1165, 2
    %v1182 = vpop.permute.xlu0 %1181
    %v1184 = vsel %vm414, 0.0, %v1182
    %v1185 = vsel %vm1179, 1, 0
    %vm1186 = vcmp.eq.s32.totalorder %v1185, 1
    %v1187 = vsel %vm1186, %v1163, %v1184
    %1188 = vset.pattern.permute.xlu0 10
    %1189 = vperm.xlu0 %1188, %v273
    %v1190 = vpop.permute.xlu0 %1189
    %v1192 = vadd.f32 %v1187, %v1190
    %v1193 = vmax.f32 %v1192, 0.0
    %v1194 = vld [vmem:[%s4 + $0xd8] sm:$0xf]
    %v1195 = vld [vmem:[%s4 + $0xdc] sm:$0xf]
    %v1196 = vld [vmem:[%s4 + $0xe0] sm:$0xf]
    %v1197 = vpack.c.bf16 %v1193, %v1193
    %v1201 = vunpack.c.l.b16 %v1194
    %v1202 = vunpack.c.l.b16 %v1195
    %v1203 = vunpack.c.l.b16 %v1196
    %v1204 = vpack.c.b16 %v1202, %v1201
    %v1205 = vpack.c.b16 %v1203, %v1203
    %v1207 = vsel %vm293, %v1204, 0
    %v1210 = vsel %vm293, %v1205, 0
    %v1213 = vsel %vm300, %v1197, 0
    %1215 = vmatpush.bf16.msra.mxu0 0
    %1216 = vmatpush.bf16.msra.mxu0 0
    %1217 = vmatpush.bf16.msra.mxu0 0
    %1218 = vmatpush.bf16.msra.mxu0 0
    %1219 = vmatpush.bf16.msra.mxu0 0
    %1220 = vmatpush.bf16.msra.mxu0 0
    %1221 = vmatpush.bf16.msra.mxu0 0
    %1222 = vmatpush.bf16.msra.mxu0 %v1213
    %1223 = vmatmul.bf16.gmra.mxu0 %v1207
    %v1224 = vpop.f32.mrf.mxu0
    %v1225 = vadd.f32 0.0, %v1224
    %v1226 = vpop.f32.mrf.mxu0
    %v1227 = vadd.f32 0.0, %v1226
    %1228 = vmatmul.bf16.gmra.mxu0 %v1210
    %v1229 = vpop.f32.mrf.mxu0
    %v1230 = vadd.f32 0.0, %v1229
    %v1231 = vpop.f32.mrf.mxu0
    %1232 = vdwg.mxu0
    %1234 = vrot.lane.b32.xlu0 %v1225, 2
    %v1235 = vpop.permute.xlu0 %1234
    %v1237 = vsel %vm414, 0.0, %v1235
    %v1238 = vsel %vm418, %v1237, 0.0
    %1240 = vrot.lane.b32.xlu0 %v1230, 126
    %v1241 = vpop.permute.xlu0 %1240
    %v1243 = vsel %vm430, %v1241, 0.0
    %v1244 = vsel %vm434, %v1243, 0.0
    %v1245 = vadd.f32 %v1238, %v1227
    %v1246 = vadd.f32 %v1245, %v1244
    %1247 = vset.pattern.permute.xlu0 11
    %1248 = vperm.xlu0 %1247, %v273
    %v1249 = vpop.permute.xlu0 %1248
    %v1251 = vadd.f32 %v1246, %v1249
    %v1252 = vadd.f32 %v1251, %v346
    %v1253 = vld [vmem:[%s4 + $0xe4] sm:$0xf]
    %v1254 = vld [vmem:[%s4 + $0xe8] sm:$0xf]
    %v1255 = vpack.c.bf16 %v1252, %v1252
    %v1258 = vunpack.c.l.b16 %v1253
    %v1259 = vunpack.c.l.b16 %v1254
    %v1260 = vpack.c.b16 %v1259, %v1258
    %v1262 = vsel %vm293, %v1260, 0
    %v1265 = vsel %vm300, %v1255, 0
    %1267 = vmatpush.bf16.msra.mxu0 0
    %1268 = vmatpush.bf16.msra.mxu0 0
    %1269 = vmatpush.bf16.msra.mxu0 0
    %1270 = vmatpush.bf16.msra.mxu0 0
    %1271 = vmatpush.bf16.msra.mxu0 0
    %1272 = vmatpush.bf16.msra.mxu0 0
    %1273 = vmatpush.bf16.msra.mxu0 0
    %1274 = vmatpush.bf16.msra.mxu0 %v1265
    %1275 = vmatmul.bf16.gmra.mxu0 %v1262
    %v1276 = vpop.f32.mrf.mxu0
    %v1277 = vadd.f32 0.0, %v1276
    %v1278 = vpop.f32.mrf.mxu0
    %v1279 = vadd.f32 0.0, %v1278
    %1280 = vdwg.mxu0
    %vm1281 = vcmp.lt.s32.totalorder %v28, 0
    %v1282 = vsub.s32 0, %v28
    %v1283 = vsel %vm1281, %v1282, %v28
    %v1284 = vshrl.u32 %v1283, 1
    %v1285 = vand.u32 %v1283, 1
    %v1286 = vsub.s32 0, %v1285
    %v1287 = vsel %vm1281, %v1286, %v1285
    %vm1288 = vcmp.ne.s32.totalorder %v1287, 0
    %vm1289 = vcmp.lt.s32.totalorder %v1287, 0
    %vm1290 = vmand %vm1289, %vm1288
    %v1291 = vadd.s32 %v1287, 2
    %v1292 = vsel %vm1290, %v1291, %v1287
    %vm1293 = vcmp.eq.s32.totalorder %v1292, 0
    %1295 = vrot.lane.b32.xlu0 %v1279, 1
    %v1296 = vpop.permute.xlu0 %1295
    %v1298 = vsel %vm221, 0.0, %v1296
    %v1299 = vsel %vm1293, %v1277, %v1298
    %v1300 = vld [vmem:[%s5] sm:$0x1]
    %1302 = vset.pattern.permute.xlu0 12
    %1303 = vperm.xlu0 %1302, %v1300
    %v1304 = vpop.permute.xlu0 %1303
    %v1306 = vadd.f32 %v1299, %v1304
    %v1307 = vmax.f32 %v1306, 0.0
    %v1308 = vld [vmem:[%s4 + $0xec] sm:$0xf]
    %v1309 = vld [vmem:[%s4 + $0xf0] sm:$0xf]
    %v1310 = vld [vmem:[%s4 + $0xf4] sm:$0xf]
    %v1311 = vpack.c.bf16 %v1307, %v1307
    %v1315 = vunpack.c.l.b16 %v1308
    %v1316 = vunpack.c.l.b16 %v1309
    %v1317 = vunpack.c.l.b16 %v1310
    %v1318 = vpack.c.b16 %v1316, %v1315
    %v1319 = vpack.c.b16 %v1317, %v1317
    %v1321 = vsel %vm221, %v1318, 0
    %v1324 = vsel %vm221, %v1319, 0
    %v1327 = vand.u32 %v1311, %v230
    %1329 = vmatpush.bf16.msra.mxu0 0
    %1330 = vmatpush.bf16.msra.mxu0 0
    %1331 = vmatpush.bf16.msra.mxu0 0
    %1332 = vmatpush.bf16.msra.mxu0 0
    %1333 = vmatpush.bf16.msra.mxu0 0
    %1334 = vmatpush.bf16.msra.mxu0 0
    %1335 = vmatpush.bf16.msra.mxu0 0
    %1336 = vmatpush.bf16.msra.mxu0 %v1327
    %1337 = vmatmul.bf16.gmra.mxu0 %v1321
    %v1338 = vpop.f32.mrf.mxu0
    %v1339 = vadd.f32 0.0, %v1338
    %v1340 = vpop.f32.mrf.mxu0
    %v1341 = vadd.f32 0.0, %v1340
    %1342 = vmatmul.bf16.gmra.mxu0 %v1324
    %v1343 = vpop.f32.mrf.mxu0
    %v1344 = vadd.f32 0.0, %v1343
    %v1345 = vpop.f32.mrf.mxu0
    %1346 = vdwg.mxu0
    %1348 = vrot.lane.b32.xlu0 %v1339, 1
    %v1349 = vpop.permute.xlu0 %1348
    %v1351 = vsel %vm221, 0.0, %v1349
    %v1352 = vsel %vm252, %v1351, 0.0
    %1354 = vrot.lane.b32.xlu0 %v1344, 127
    %v1355 = vpop.permute.xlu0 %1354
    %v1357 = vsel %vm266, %v1355, 0.0
    %v1358 = vsel %vm261, %v1357, 0.0
    %v1359 = vadd.f32 %v1352, %v1341
    %v1360 = vadd.f32 %v1359, %v1358
    %1361 = vset.pattern.permute.xlu0 13
    %1362 = vperm.xlu0 %1361, %v1300
    %v1363 = vpop.permute.xlu0 %1362
    %v1365 = vadd.f32 %v1360, %v1363
    %1366 = vset.pattern.permute.xlu0 14
    %1367 = vperm.xlu0 %1366, %v1300
    %v1368 = vpop.permute.xlu0 %1367
    %v1370 = vmul.f32 %v1365, %v1368
    %1371 = vset.pattern.permute.xlu0 15
    %1372 = vperm.xlu0 %1371, %v1300
    %v1373 = vpop.permute.xlu0 %1372
    %v1375 = vadd.f32 %v1370, %v1373
    %vm1376 = vcmask 253952
    %1377 = vst.msk [vmem:[%s6] sm:$0x1] %vm1376, %v1375
    // Predicated region
    $region26: #{unet1d_forward.1} parent=1 // pred_check
      _
    $region27: #{unet1d_forward.1} parent=1 // pred_check_branch
      %1379 = sbr.rel (0) target = $region29
    $region28: #{unet1d_forward.1} parent=1 // pred_region
      _
    $region29: #{unet1d_forward.1} parent=1 // pred_fallthru
      _
    // Predicated region
    $region30: #{unet1d_forward.1} parent=1 // pred_check
      _
    $region31: #{unet1d_forward.1} parent=1 // pred_check_branch
      %1381 = sbr.rel (0) target = $region33
    $region32: #{unet1d_forward.1} parent=1 // pred_region
      %1383 = vsyncadd [#allocation3], 0
      %s1385 = sshll.u32 [#allocation2], 4
      %s1386 = int_to_ptr.vmem [resolvable:$true] %s1385
      %s1387 = sshll.u32 %s7, 4
      %s1388 = int_to_ptr.hbm [resolvable:$true] %s1387
      %1390 = dma.vmem_to_hbm [thread:$0]  %s1386, 32, %s1388, [#allocation3]
    $region33: #{unet1d_forward.1} parent=1 // pred_fallthru
      _
    // Predicated region
    $region34: #{unet1d_forward.1} parent=1 // pred_check
      _
    $region35: #{unet1d_forward.1} parent=1 // pred_check_branch
      %1392 = sbr.rel (0) target = $region37
    $region36: #{unet1d_forward.1} parent=1 // pred_region
      _
    $region37: #{unet1d_forward.1} parent=1 // pred_fallthru
      _
    // Predicated region
    $region38: #{unet1d_forward.1} parent=1 // pred_check
      _
    $region39: #{unet1d_forward.1} parent=1 // pred_check_branch
      %1394 = sbr.rel (0) target = $region41
    $region40: #{unet1d_forward.1} parent=1 // pred_region
      %1396 = dma.done [#allocation3], 32
    $region41: #{unet1d_forward.1} parent=1 // pred_fallthru
      _
    %1397 = vsyncpa [#allocation3], 1

</llo_original>
